<compile_context>
chip_gen: v5e
topology: v5e:2x2
jax: 0.10.0
libtpu: 0.0.40
codegen_flags: <defaults>
</compile_context>

<pallas_src>
import functools
import math

import jax
import jax.numpy as jnp
from jax import lax
from jax.experimental import pallas as pl
from jax.experimental.pallas import tpu as pltpu

_LANE = 128                      # TPU vreg lane width
_MATMUL_DTYPE = jnp.bfloat16     # MXU input dtype (accumulation is always f32)
_TQ_MAX = 256                    # query-tile length (multiple of 128)


def _gelu_exact(x):
    # PyTorch nn.GELU() default: exact erf-based GELU (kept for numerical
    # fidelity; the tanh approximation would shift work to the EUP).
    return 0.5 * x * (1.0 + lax.erf(x * (1.0 / math.sqrt(2.0))))


def _deeppm_layer_kernel(x_ref, mbias_ref,
                         wqkv_ref, bqkv_ref, wo_ref, bo_ref,
                         w1_ref, b1_ref, w2_ref, b2_ref,
                         out_ref, qkv_s, attn_s, *, n_heads, tq):
    """One DeepPMTransformerEncoderLayer forward for one (batch, q-tile) step.

    x_ref:     (1, S_pad, D) untransposed activations (f32), full sequence
    mbias_ref: (1, 1, S_pad) additive key-padding bias (0 or -1e9, f32)
    wqkv_ref:  (3D, D) fused [Wq; Wk; Wv] in (out, in) layout, bf16
    bqkv_ref:  (3D, 1) fused q/k/v bias (column vector, broadcasts over S)
    wo_ref:    (D, D) (in, out), bo_ref: (1, D)
    w1_ref:    (D, F),           b1_ref: (1, F)
    w2_ref:    (F, D),           b2_ref: (1, D)
    out_ref:   (1, TQ, D)
    qkv_s:     (3D, S_pad) VMEM scratch — fused QKV, computed once per batch
    attn_s:    (D, TQ)     VMEM scratch — per-head attention outputs
    """
    D = wo_ref.shape[0]
    dh = D // n_heads
    scale = 1.0 / math.sqrt(dh)
    cdt = wqkv_ref.dtype                         # MXU input dtype (bf16)

    # --- Once per batch element: fused QKV projection for the FULL sequence.
    # The (b) input block index is constant over the q-tile axis, so the
    # (S_pad, D) slab is DMA'd only once per batch element.
    @pl.when(pl.program_id(1) == 0)
    def _():
        x_full = x_ref[0].astype(cdt)                               # (S, D)
        qkv = lax.dot_general(wqkv_ref[...], x_full,
                              (((1,), (1,)), ((), ())),
                              preferred_element_type=jnp.float32)   # (3D, S)
        qkv_s[...] = (qkv + bqkv_ref[...]).astype(qkv_s.dtype)

    q_off = pl.multiple_of(pl.program_id(1) * tq, tq)
    mbias = mbias_ref[0].astype(jnp.float32)                        # (1, S)

    # --- Per-head attention.  Rolled loop: only ONE head's (TQ, S) score
    # block is live at a time; each head writes its (dh, TQ) output into a
    # contiguous sublane block of attn_s (no concat, no f32 transposes).
    @pl.loop(0, n_heads)
    def _(h):
        r = pl.multiple_of(h * dh, dh)
        qh = qkv_s[pl.ds(r, dh), pl.ds(q_off, tq)].astype(cdt)              # (dh, TQ)
        kh = qkv_s[pl.ds(pl.multiple_of(D + r, dh), dh), :].astype(cdt)     # (dh, S)
        vh = qkv_s[pl.ds(pl.multiple_of(2 * D + r, dh), dh), :].astype(cdt) # (dh, S)

        # Head-dim contraction expressed directly (no explicit Q transpose).
        s = lax.dot_general(qh, kh, (((0,), (0,)), ((), ())),
                            preferred_element_type=jnp.float32) * scale     # (TQ, S)
        s = s + mbias                                   # key-padding bias
        s = s - jnp.max(s, axis=-1, keepdims=True)
        p = jnp.exp(s)
        p = p * pl.reciprocal(jnp.sum(p, axis=-1, keepdims=True), approx=True)

        # o_t[e, i] = sum_j v[j, e] * p[i, j]  ->  NT matmul, output (dh, TQ).
        o_t = lax.dot_general(vh, p.astype(cdt), (((1,), (1,)), ((), ())),
                              preferred_element_type=jnp.float32)
        attn_s[pl.ds(r, dh), :] = o_t.astype(attn_s.dtype)

    # --- Back to row-major: ONE in-VMEM transpose per tile (bf16), then
    # output projection, residual, and the position-wise FFN with lane-dense
    # (1, X) biases.  Dropout == 0 at the reference defaults.
    attn_row = attn_s[...].astype(cdt).T                             # (TQ, D)
    proj = jnp.dot(attn_row, wo_ref[...],
                   preferred_element_type=jnp.float32) + bo_ref[...]
    x_tile = x_ref[0, pl.ds(q_off, tq), :].astype(jnp.float32)       # (TQ, D)
    h1 = x_tile + proj

    ff = jnp.dot(h1.astype(cdt), w1_ref[...],
                 preferred_element_type=jnp.float32) + b1_ref[...]
    ff = _gelu_exact(ff)
    ff = jnp.dot(ff.astype(cdt), w2_ref[...],
                 preferred_element_type=jnp.float32) + b2_ref[...]

    out_ref[0] = (h1 + ff).astype(out_ref.dtype)


def _vmem_limit_bytes():
    # Use most of the chip's scratchpad (v6e/v5e: 128 MiB -> 96 MiB cap,
    # v7x: 64 MiB -> 48 MiB).  Fall back to 64 MiB if the query fails.
    try:
        cap = int(pltpu.get_tpu_info().vmem_capacity_bytes)
        return max(32 * 1024 * 1024, min(3 * cap // 4, 96 * 1024 * 1024))
    except Exception:
        return 64 * 1024 * 1024


def _weight_spec(shape):
    # Constant block index across the whole grid -> single-buffer it; a
    # second buffer would be pure VMEM waste (~6 MB of bf16 weights at
    # D=512 / F=2048).
    idx = lambda b, q: (0,) * len(shape)
    try:
        return pl.BlockSpec(shape, idx, pipeline_mode=pl.Buffered(1))
    except TypeError:  # older BlockSpec without pipeline_mode support
        return pl.BlockSpec(shape, idx)


def _encoder_layer_forward(x, mbias, w, n_heads, tq):
    B, s_pad, D = x.shape
    F = w["w1"].shape[1]
    TD = w["wqkv_t"].shape[0]
    nq = s_pad // tq
    dh = D // n_heads
    # bf16 scratch only when head slices stay aligned to the bf16 sublane
    # packing (16 rows); otherwise keep f32 for clean dynamic sublane slices.
    scr_dtype = _MATMUL_DTYPE if dh % 16 == 0 else jnp.float32

    in_specs = [
        pl.BlockSpec((1, s_pad, D), lambda b, q: (b, 0, 0)),   # activations (full S)
        pl.BlockSpec((1, 1, s_pad), lambda b, q: (b, 0, 0)),   # key-padding bias
        _weight_spec((TD, D)), _weight_spec((TD, 1)),          # fused Wqkv, bqkv
        _weight_spec((D, D)), _weight_spec((1, D)),            # Wo, bo
        _weight_spec((D, F)), _weight_spec((1, F)),            # W1, b1
        _weight_spec((F, D)), _weight_spec((1, D)),            # W2, b2
    ]
    out_specs = pl.BlockSpec((1, tq, D), lambda b, q: (b, q, 0))

    kernel = functools.partial(_deeppm_layer_kernel, n_heads=n_heads, tq=tq)
    return pl.pallas_call(
        kernel,
        out_shape=jax.ShapeDtypeStruct((B, s_pad, D), jnp.float32),
        grid_spec=pltpu.PrefetchScalarGridSpec(
            num_scalar_prefetch=0,
            grid=(B, nq),
            in_specs=in_specs,
            out_specs=out_specs,
            scratch_shapes=[
                pltpu.VMEM((TD, s_pad), scr_dtype),   # fused QKV (per batch)
                pltpu.VMEM((D, tq), scr_dtype),       # per-tile head outputs
            ],
        ),
        compiler_params=pltpu.CompilerParams(
            # batch axis sharded across v7x cores; q-tile axis carries the
            # QKV scratch so it must stay sequential.
            dimension_semantics=("parallel", "arbitrary"),
            vmem_limit_bytes=_vmem_limit_bytes(),
        ),
    )(x, mbias,
      w["wqkv_t"], w["bqkv"], w["wo"], w["bo"],
      w["w1"], w["b1"], w["w2"], w["b2"])


def _prepare_layer_weights(p):
    """Fuse Q/K/V into one (3D, D) (out,in) matrix; all other weights stay in
    their natural (in, out) layout (no host transposes).  Weights bf16 for the
    MXU, biases f32."""
    wqkv_t = jnp.concatenate([p["wq"].T, p["wk"].T, p["wv"].T], axis=0)  # (3D, D)
    bqkv = jnp.concatenate([p["bq"], p["bk"], p["bv"]], axis=1).T        # (3D, 1)
    return {
        "wqkv_t": wqkv_t.astype(_MATMUL_DTYPE),
        "bqkv": bqkv.astype(jnp.float32),
        "wo": p["wo"].astype(_MATMUL_DTYPE), "bo": p["bo"].astype(jnp.float32),
        "w1": p["w1"].astype(_MATMUL_DTYPE), "b1": p["b1"].astype(jnp.float32),
        "w2": p["w2"].astype(_MATMUL_DTYPE), "b2": p["b2"].astype(jnp.float32),
    }


def deeppm_transformer_encoder(src, src_key_padding_mask, params, n_heads):
    """Replicates DeePPMTransformerEncoder.forward at the module defaults.

    src:                  (B, S, D) float32
    src_key_padding_mask: (B, S) bool, True = padded position (masked keys)
    params:               list of per-layer weight dicts (see init_params)

    Only the last layer is computed: the reference loop applies every layer to
    the ORIGINAL `src` and returns the last result, so earlier layers are pure
    dead work and their removal is numerically exact.
    """
    B, S, D = src.shape
    assert D % n_heads == 0

    # Pad the sequence axis to a multiple of the query tile (itself a multiple
    # of the 128-lane width).  Padded keys are masked, padded queries sliced.
    s_pad = -(-S // _LANE) * _LANE
    tq = _TQ_MAX if s_pad % _TQ_MAX == 0 else _LANE
    pad = s_pad - S

    if src_key_padding_mask is None:
        key_mask = jnp.zeros((B, S), jnp.bool_)
    else:
        key_mask = src_key_padding_mask.astype(jnp.bool_)
    x = src.astype(jnp.float32)
    if pad:
        x = jnp.pad(x, ((0, 0), (0, pad), (0, 0)))
        key_mask = jnp.pad(key_mask, ((0, 0), (0, pad)), constant_values=True)
    # -1e9 (not -inf) so fully-masked rows stay finite.
    mbias = jnp.where(key_mask, -1e9, 0.0).astype(jnp.float32).reshape(B, 1, s_pad)

    w = _prepare_layer_weights(params[-1])
    out = _encoder_layer_forward(x, mbias, w, n_heads, tq)   # (B, s_pad, D)
    return out[:, :S, :].astype(src.dtype)


def init_params(key, num_layers, dim, dim_ff):
    params = []
    for _ in range(num_layers):
        key, *ks = jax.random.split(key, 9)
        s = 0.05
        params.append({
            "wq": s * jax.random.normal(ks[0], (dim, dim), jnp.float32),
            "bq": jnp.zeros((1, dim), jnp.float32),
            "wk": s * jax.random.normal(ks[1], (dim, dim), jnp.float32),
            "bk": jnp.zeros((1, dim), jnp.float32),
            "wv": s * jax.random.normal(ks[2], (dim, dim), jnp.float32),
            "bv": jnp.zeros((1, dim), jnp.float32),
            "wo": s * jax.random.normal(ks[3], (dim, dim), jnp.float32),
            "bo": s * jax.random.normal(ks[4], (1, dim), jnp.float32),
            "w1": s * jax.random.normal(ks[5], (dim, dim_ff), jnp.float32),
            "b1": s * jax.random.normal(ks[6], (1, dim_ff), jnp.float32),
            "w2": s * jax.random.normal(ks[7], (dim_ff, dim), jnp.float32),
            "b2": jnp.zeros((1, dim), jnp.float32),
        })
    return params


def _reference_forward(src, key_mask, p, n_heads):
    """Pure-JAX reference for the last encoder layer (f32)."""
    x = src.astype(jnp.float32)
    B, S, D = x.shape
    dh = D // n_heads
    q = x @ p["wq"] + p["bq"]
    k = x @ p["wk"] + p["bk"]
    v = x @ p["wv"] + p["bv"]
    split = lambda t: t.reshape(B, S, n_heads, dh).transpose(0, 2, 1, 3)
    qh, kh, vh = split(q), split(k), split(v)
    s = jnp.einsum("bhqd,bhkd->bhqk", qh, kh) / math.sqrt(dh)
    s = s + jnp.where(key_mask, -1e9, 0.0)[:, None, None, :]
    pattn = jax.nn.softmax(s, axis=-1)
    o = jnp.einsum("bhqk,bhkd->bhqd", pattn, vh)
    o = o.transpose(0, 2, 1, 3).reshape(B, S, D)
    h1 = x + (o @ p["wo"] + p["bo"])
    ff = jax.nn.gelu(h1 @ p["w1"] + p["b1"], approximate=False)
    ff = ff @ p["w2"] + p["b2"]
    return h1 + ff


if __name__ == "__main__":
    # Small config consistent with the module: num_layers=2, dim=32, heads=4.
    B, S, D = 2, 8, 32
    N_HEADS = 4
    DIM_FF = 64
    NUM_LAYERS = 2

    key = jax.random.PRNGKey(0)
    k_src, k_par = jax.random.split(key)
    src = jax.random.normal(k_src, (B, S, D), jnp.float32)

    # key_padding_mask: last two positions of batch 1 are padding.
    mask = jnp.zeros((B, S), jnp.bool_).at[1, -2:].set(True)

    params = init_params(k_par, NUM_LAYERS, D, DIM_FF)

    out = deeppm_transformer_encoder(src, mask, params, N_HEADS)
    jax.block_until_ready(out)
    assert out.shape == (B, S, D)
    assert bool(jnp.all(jnp.isfinite(out)))

    ref = _reference_forward(src, mask, params[-1], N_HEADS)
    assert bool(jnp.allclose(out, ref, atol=1e-1, rtol=1e-1))

    print("KERNEL_OK")
</pallas_src>

<mosaic_0001>
module attributes {stable_mosaic.version = 11 : i64} {
  func.func @_deeppm_layer_kernel(%arg0: i32, %arg1: i32, %arg2: memref<1x128x32xf32, #tpu.memory_space<vmem>>, %arg3: memref<1x1x128xf32, #tpu.memory_space<vmem>>, %arg4: memref<96x32xbf16, #tpu.memory_space<vmem>>, %arg5: memref<96x1xf32, #tpu.memory_space<vmem>>, %arg6: memref<32x32xbf16, #tpu.memory_space<vmem>>, %arg7: memref<1x32xf32, #tpu.memory_space<vmem>>, %arg8: memref<32x64xbf16, #tpu.memory_space<vmem>>, %arg9: memref<1x64xf32, #tpu.memory_space<vmem>>, %arg10: memref<64x32xbf16, #tpu.memory_space<vmem>>, %arg11: memref<1x32xf32, #tpu.memory_space<vmem>>, %arg12: memref<1x128x32xf32, #tpu.memory_space<vmem>>, %arg13: memref<96x128xf32, #tpu.memory_space<vmem>>, %arg14: memref<32x128xf32, #tpu.memory_space<vmem>>) attributes {dimension_semantics = [#tpu.dimension_semantics<parallel>, #tpu.dimension_semantics<arbitrary>], iteration_bounds = array<i64: 2, 1>, scalar_prefetch = 0 : i64, scratch_operands = 2 : i64, tpu.core_type = #tpu.core_type<tc>, window_params = [{transform_indices = @transform_0, window_bounds = array<i64: 1, 128, 32>}, {transform_indices = @transform_1, window_bounds = array<i64: 1, 1, 128>}, {pipeline_mode = #tpu.pipeline_mode<synchronous>, transform_indices = @transform_2, window_bounds = array<i64: 96, 32>}, {pipeline_mode = #tpu.pipeline_mode<synchronous>, transform_indices = @transform_3, window_bounds = array<i64: 96, 1>}, {pipeline_mode = #tpu.pipeline_mode<synchronous>, transform_indices = @transform_4, window_bounds = array<i64: 32, 32>}, {pipeline_mode = #tpu.pipeline_mode<synchronous>, transform_indices = @transform_5, window_bounds = array<i64: 1, 32>}, {pipeline_mode = #tpu.pipeline_mode<synchronous>, transform_indices = @transform_6, window_bounds = array<i64: 32, 64>}, {pipeline_mode = #tpu.pipeline_mode<synchronous>, transform_indices = @transform_7, window_bounds = array<i64: 1, 64>}, {pipeline_mode = #tpu.pipeline_mode<synchronous>, transform_indices = @transform_8, window_bounds = array<i64: 64, 32>}, {pipeline_mode = #tpu.pipeline_mode<synchronous>, transform_indices = @transform_9, window_bounds = array<i64: 1, 32>}, {transform_indices = @transform_10, window_bounds = array<i64: 1, 128, 32>}]} {
    %c0_i32 = arith.constant 0 : i32
    %0 = arith.cmpi eq, %arg1, %c0_i32 : i32
    %1 = arith.extui %0 : i1 to i32
    %c0_i32_0 = arith.constant 0 : i32
    %2 = arith.cmpi ne, %1, %c0_i32_0 : i32
    scf.if %2 {
      %c0_29 = arith.constant 0 : index
      %c0_30 = arith.constant 0 : index
      %c0_31 = arith.constant 0 : index
      %44 = vector.load %arg2[%c0_29, %c0_30, %c0_31] : memref<1x128x32xf32, #tpu.memory_space<vmem>>, vector<1x128x32xf32>
      %45 = vector.shape_cast %44 : vector<1x128x32xf32> to vector<128x32xf32>
      %46 = arith.truncf %45 : vector<128x32xf32> to vector<128x32xbf16>
      %c0_32 = arith.constant 0 : index
      %c0_33 = arith.constant 0 : index
      %47 = vector.load %arg4[%c0_32, %c0_33] : memref<96x32xbf16, #tpu.memory_space<vmem>>, vector<96x32xbf16>
      %cst_34 = arith.constant dense<0.000000e+00> : vector<96x128xf32>
      %48 = tpu.matmul %47, %46, %cst_34 {dimension_numbers = #tpu.dot_dimension_numbers<[1], [1], [0], [0], [0, 0, 1, 0], [], []>} : vector<96x32xbf16>, vector<128x32xbf16>, vector<96x128xf32> -> vector<96x128xf32>
      %c0_35 = arith.constant 0 : index
      %c0_36 = arith.constant 0 : index
      %49 = vector.load %arg5[%c0_35, %c0_36] : memref<96x1xf32, #tpu.memory_space<vmem>>, vector<96x1xf32>
      %50 = vector.broadcast %49 : vector<96x1xf32> to vector<96x128xf32>
      %51 = arith.addf %48, %50 : vector<96x128xf32>
      %c0_37 = arith.constant 0 : index
      %c0_38 = arith.constant 0 : index
      %52 = vector.load %arg13[%c0_37, %c0_38] : memref<96x128xf32, #tpu.memory_space<vmem>>, vector<96x128xf32>
      tpu.vector_store %arg13[%c0_37, %c0_38], %51 {strides = array<i32>} : memref<96x128xf32, #tpu.memory_space<vmem>>, vector<96x128xf32>,
    } else {
    }
    %c128_i32 = arith.constant 128 : i32
    %3 = arith.muli %arg1, %c128_i32 : i32
    %4 = tpu.assume_multiple %3, 128 : i32
    %c0 = arith.constant 0 : index
    %c0_1 = arith.constant 0 : index
    %c0_2 = arith.constant 0 : index
    %5 = vector.load %arg3[%c0, %c0_1, %c0_2] : memref<1x1x128xf32, #tpu.memory_space<vmem>>, vector<1x1x128xf32>
    %6 = vector.shape_cast %5 : vector<1x1x128xf32> to vector<1x128xf32>
    %c0_i32_3 = arith.constant 0 : i32
    %c4_i32 = arith.constant 4 : i32
    %7 = arith.addi %c0_i32_3, %c4_i32 : i32
    %c1_i32 = arith.constant 1 : i32
    scf.for %arg15 = %c0_i32_3 to %7 step %c1_i32  : i32 {
      %c1_i32_29 = arith.constant 1 : i32
      %44 = arith.muli %arg15, %c1_i32_29 : i32
      %c0_i32_30 = arith.constant 0 : i32
      %45 = arith.addi %c0_i32_30, %44 : i32
      %c8_i32 = arith.constant 8 : i32
      %46 = arith.muli %45, %c8_i32 : i32
      %47 = tpu.assume_multiple %46, 8 : i32
      %48 = arith.index_cast %47 : i32 to index
      %49 = arith.index_cast %4 : i32 to index
      %50 = vector.load %arg13[%48, %49] : memref<96x128xf32, #tpu.memory_space<vmem>>, vector<8x128xf32>
      %51 = arith.truncf %50 : vector<8x128xf32> to vector<8x128xbf16>
      %c32_i32 = arith.constant 32 : i32
      %52 = arith.addi %c32_i32, %47 : i32
      %53 = tpu.assume_multiple %52, 8 : i32
      %54 = arith.index_cast %53 : i32 to index
      %c0_31 = arith.constant 0 : index
      %55 = vector.load %arg13[%54, %c0_31] : memref<96x128xf32, #tpu.memory_space<vmem>>, vector<8x128xf32>
      %56 = arith.truncf %55 : vector<8x128xf32> to vector<8x128xbf16>
      %c64_i32 = arith.constant 64 : i32
      %57 = arith.addi %c64_i32, %47 : i32
      %58 = tpu.assume_multiple %57, 8 : i32
      %59 = arith.index_cast %58 : i32 to index
      %c0_32 = arith.constant 0 : index
      %60 = vector.load %arg13[%59, %c0_32] : memref<96x128xf32, #tpu.memory_space<vmem>>, vector<8x128xf32>
      %61 = arith.truncf %60 : vector<8x128xf32> to vector<8x128xbf16>
      %cst_33 = arith.constant dense<0.000000e+00> : vector<128x128xf32>
      %62 = tpu.matmul %51, %56, %cst_33 {dimension_numbers = #tpu.dot_dimension_numbers<[0], [0], [1], [1], [0, 1, 1, 1], [], []>} : vector<8x128xbf16>, vector<8x128xbf16>, vector<128x128xf32> -> vector<128x128xf32>
      %cst_34 = arith.constant 0.353553385 : f32
      %63 = vector.broadcast %cst_34 : f32 to vector<128x128xf32>
      %64 = arith.mulf %62, %63 : vector<128x128xf32>
      %65 = vector.broadcast %6 : vector<1x128xf32> to vector<128x128xf32>
      %66 = arith.addf %64, %65 : vector<128x128xf32>
      %cst_35 = arith.constant dense<0xFF800000> : vector<128xf32>
      %67 = vector.multi_reduction <maximumf>, %66, %cst_35 [1] : vector<128x128xf32> to vector<128xf32>
      %68 = vector.shape_cast %67 : vector<128xf32> to vector<128x1xf32>
      %69 = vector.broadcast %68 : vector<128x1xf32> to vector<128x128xf32>
      %70 = arith.subf %66, %69 : vector<128x128xf32>
      %71 = math.exp %70 : vector<128x128xf32>
      %cst_36 = arith.constant dense<0.000000e+00> : vector<128xf32>
      %72 = vector.multi_reduction <add>, %71, %cst_36 [1] : vector<128x128xf32> to vector<128xf32>
      %73 = vector.shape_cast %72 : vector<128xf32> to vector<128x1xf32>
      %74 = tpu.reciprocal %73 {approx = true} : vector<128x1xf32> -> vector<128x1xf32>
      %75 = vector.broadcast %74 : vector<128x1xf32> to vector<128x128xf32>
      %76 = arith.mulf %71, %75 : vector<128x128xf32>
      %77 = arith.truncf %76 : vector<128x128xf32> to vector<128x128xbf16>
      %cst_37 = arith.constant dense<0.000000e+00> : vector<8x128xf32>
      %78 = tpu.matmul %61, %77, %cst_37 {dimension_numbers = #tpu.dot_dimension_numbers<[1], [1], [0], [0], [0, 0, 1, 0], [], []>} : vector<8x128xbf16>, vector<128x128xbf16>, vector<8x128xf32> -> vector<8x128xf32>
      %79 = arith.index_cast %47 : i32 to index
      %c0_38 = arith.constant 0 : index
      %80 = vector.load %arg14[%79, %c0_38] : memref<32x128xf32, #tpu.memory_space<vmem>>, vector<8x128xf32>
      tpu.vector_store %arg14[%79, %c0_38], %78 {strides = array<i32>} : memref<32x128xf32, #tpu.memory_space<vmem>>, vector<8x128xf32>,
    }
    %c4_i32_4 = arith.constant 4 : i32
    %c0_5 = arith.constant 0 : index
    %c0_6 = arith.constant 0 : index
    %8 = vector.load %arg14[%c0_5, %c0_6] : memref<32x128xf32, #tpu.memory_space<vmem>>, vector<32x128xf32>
    %9 = arith.truncf %8 : vector<32x128xf32> to vector<32x128xbf16>
    %10 = tpu.transpose %9, [1, 0] : vector<32x128xbf16> -> vector<128x32xbf16>
    %c0_7 = arith.constant 0 : index
    %c0_8 = arith.constant 0 : index
    %11 = vector.load %arg6[%c0_7, %c0_8] : memref<32x32xbf16, #tpu.memory_space<vmem>>, vector<32x32xbf16>
    %cst = arith.constant dense<0.000000e+00> : vector<128x32xf32>
    %12 = tpu.matmul %10, %11, %cst {dimension_numbers = #tpu.dot_dimension_numbers<[1], [0], [0], [1], [0, 0, 1, 1], [], []>} : vector<128x32xbf16>, vector<32x32xbf16>, vector<128x32xf32> -> vector<128x32xf32>
    %c0_9 = arith.constant 0 : index
    %c0_10 = arith.constant 0 : index
    %13 = vector.load %arg7[%c0_9, %c0_10] : memref<1x32xf32, #tpu.memory_space<vmem>>, vector<1x32xf32>
    %14 = vector.broadcast %13 : vector<1x32xf32> to vector<128x32xf32>
    %15 = arith.addf %12, %14 : vector<128x32xf32>
    %c0_11 = arith.constant 0 : index
    %16 = arith.index_cast %4 : i32 to index
    %c0_12 = arith.constant 0 : index
    %17 = vector.load %arg2[%c0_11, %16, %c0_12] : memref<1x128x32xf32, #tpu.memory_space<vmem>>, vector<1x128x32xf32>
    %18 = vector.shape_cast %17 : vector<1x128x32xf32> to vector<128x32xf32>
    %19 = arith.addf %18, %15 : vector<128x32xf32>
    %20 = arith.truncf %19 : vector<128x32xf32> to vector<128x32xbf16>
    %c0_13 = arith.constant 0 : index
    %c0_14 = arith.constant 0 : index
    %21 = vector.load %arg8[%c0_13, %c0_14] : memref<32x64xbf16, #tpu.memory_space<vmem>>, vector<32x64xbf16>
    %cst_15 = arith.constant dense<0.000000e+00> : vector<128x64xf32>
    %22 = tpu.matmul %20, %21, %cst_15 {dimension_numbers = #tpu.dot_dimension_numbers<[1], [0], [0], [1], [0, 0, 1, 1], [], []>} : vector<128x32xbf16>, vector<32x64xbf16>, vector<128x64xf32> -> vector<128x64xf32>
    %c0_16 = arith.constant 0 : index
    %c0_17 = arith.constant 0 : index
    %23 = vector.load %arg9[%c0_16, %c0_17] : memref<1x64xf32, #tpu.memory_space<vmem>>, vector<1x64xf32>
    %24 = vector.broadcast %23 : vector<1x64xf32> to vector<128x64xf32>
    %25 = arith.addf %22, %24 : vector<128x64xf32>
    %cst_18 = arith.constant 5.000000e-01 : f32
    %26 = vector.broadcast %cst_18 : f32 to vector<128x64xf32>
    %27 = arith.mulf %26, %25 : vector<128x64xf32>
    %cst_19 = arith.constant 0.707106769 : f32
    %28 = vector.broadcast %cst_19 : f32 to vector<128x64xf32>
    %29 = arith.mulf %25, %28 : vector<128x64xf32>
    %30 = math.erf %29 : vector<128x64xf32>
    %cst_20 = arith.constant 1.000000e+00 : f32
    %31 = vector.broadcast %cst_20 : f32 to vector<128x64xf32>
    %32 = arith.addf %31, %30 : vector<128x64xf32>
    %33 = arith.mulf %27, %32 : vector<128x64xf32>
    %34 = arith.truncf %33 : vector<128x64xf32> to vector<128x64xbf16>
    %c0_21 = arith.constant 0 : index
    %c0_22 = arith.constant 0 : index
    %35 = vector.load %arg10[%c0_21, %c0_22] : memref<64x32xbf16, #tpu.memory_space<vmem>>, vector<64x32xbf16>
    %cst_23 = arith.constant dense<0.000000e+00> : vector<128x32xf32>
    %36 = tpu.matmul %34, %35, %cst_23 {dimension_numbers = #tpu.dot_dimension_numbers<[1], [0], [0], [1], [0, 0, 1, 1], [], []>} : vector<128x64xbf16>, vector<64x32xbf16>, vector<128x32xf32> -> vector<128x32xf32>
    %c0_24 = arith.constant 0 : index
    %c0_25 = arith.constant 0 : index
    %37 = vector.load %arg11[%c0_24, %c0_25] : memref<1x32xf32, #tpu.memory_space<vmem>>, vector<1x32xf32>
    %38 = vector.broadcast %37 : vector<1x32xf32> to vector<128x32xf32>
    %39 = arith.addf %36, %38 : vector<128x32xf32>
    %40 = arith.addf %19, %39 : vector<128x32xf32>
    %c0_26 = arith.constant 0 : index
    %c0_27 = arith.constant 0 : index
    %c0_28 = arith.constant 0 : index
    %41 = vector.load %arg12[%c0_26, %c0_27, %c0_28] : memref<1x128x32xf32, #tpu.memory_space<vmem>>, vector<1x128x32xf32>
    %42 = vector.shape_cast %41 : vector<1x128x32xf32> to vector<128x32xf32>
    %43 = vector.shape_cast %40 : vector<128x32xf32> to vector<1x128x32xf32>
    tpu.vector_store %arg12[%c0_26, %c0_27, %c0_28], %43 {strides = array<i32>} : memref<1x128x32xf32, #tpu.memory_space<vmem>>, vector<1x128x32xf32>,
    return
  }
  func.func @transform_0(%arg0: i32, %arg1: i32) -> (i32, i32, i32) {
    %c0_i32 = arith.constant 0 : i32
    %c0_i32_0 = arith.constant 0 : i32
    %c0_i32_1 = arith.constant 0 : i32
    return %arg0, %c0_i32, %c0_i32_0 : i32, i32, i32
  }
  func.func @transform_1(%arg0: i32, %arg1: i32) -> (i32, i32, i32) {
    %c0_i32 = arith.constant 0 : i32
    %c0_i32_0 = arith.constant 0 : i32
    %c0_i32_1 = arith.constant 0 : i32
    return %arg0, %c0_i32, %c0_i32_0 : i32, i32, i32
  }
  func.func @transform_2(%arg0: i32, %arg1: i32) -> (i32, i32) {
    %c0_i32 = arith.constant 0 : i32
    %c0_i32_0 = arith.constant 0 : i32
    %c0_i32_1 = arith.constant 0 : i32
    return %c0_i32, %c0_i32_0 : i32, i32
  }
  func.func @transform_3(%arg0: i32, %arg1: i32) -> (i32, i32) {
    %c0_i32 = arith.constant 0 : i32
    %c0_i32_0 = arith.constant 0 : i32
    %c0_i32_1 = arith.constant 0 : i32
    return %c0_i32, %c0_i32_0 : i32, i32
  }
  func.func @transform_4(%arg0: i32, %arg1: i32) -> (i32, i32) {
    %c0_i32 = arith.constant 0 : i32
    %c0_i32_0 = arith.constant 0 : i32
    %c0_i32_1 = arith.constant 0 : i32
    return %c0_i32, %c0_i32_0 : i32, i32
  }
  func.func @transform_5(%arg0: i32, %arg1: i32) -> (i32, i32) {
    %c0_i32 = arith.constant 0 : i32
    %c0_i32_0 = arith.constant 0 : i32
    %c0_i32_1 = arith.constant 0 : i32
    return %c0_i32, %c0_i32_0 : i32, i32
  }
  func.func @transform_6(%arg0: i32, %arg1: i32) -> (i32, i32) {
    %c0_i32 = arith.constant 0 : i32
    %c0_i32_0 = arith.constant 0 : i32
    %c0_i32_1 = arith.constant 0 : i32
    return %c0_i32, %c0_i32_0 : i32, i32
  }
  func.func @transform_7(%arg0: i32, %arg1: i32) -> (i32, i32) {
    %c0_i32 = arith.constant 0 : i32
    %c0_i32_0 = arith.constant 0 : i32
    %c0_i32_1 = arith.constant 0 : i32
    return %c0_i32, %c0_i32_0 : i32, i32
  }
  func.func @transform_8(%arg0: i32, %arg1: i32) -> (i32, i32) {
    %c0_i32 = arith.constant 0 : i32
    %c0_i32_0 = arith.constant 0 : i32
    %c0_i32_1 = arith.constant 0 : i32
    return %c0_i32, %c0_i32_0 : i32, i32
  }
  func.func @transform_9(%arg0: i32, %arg1: i32) -> (i32, i32) {
    %c0_i32 = arith.constant 0 : i32
    %c0_i32_0 = arith.constant 0 : i32
    %c0_i32_1 = arith.constant 0 : i32
    return %c0_i32, %c0_i32_0 : i32, i32
  }
  func.func @transform_10(%arg0: i32, %arg1: i32) -> (i32, i32, i32) {
    %c0_i32 = arith.constant 0 : i32
    %c0_i32_0 = arith.constant 0 : i32
    return %arg0, %arg1, %c0_i32 : i32, i32, i32
  }
}

</mosaic_0001>

<llo_original>
// kernel: tpu_custom_call.1
$region0: #{tpu_custom_call.1}
  #allocation0 [shape = 'u32[]', space=smem, size = 0x4, offset = 0x4, fixed_abs, tag = 'smem constant byte address 0x4 - core index']
  #allocation1 [shape = 'u32[72,128]{1,0:T(1,128)}', space=vmem, size = 0x9000, scoped, tag = 'internal scratch']
  #allocation2 [shape = 'f32[96,128]{1,0:T(8,128)}', space=vmem, size = 0xc000, scoped, tag = 'scratch operand']
  #allocation3 [shape = 'f32[32,128]{1,0:T(8,128)}', space=vmem, size = 0x4000, scoped, tag = 'scratch operand']
  %s0 = inlined_call_operand.vmem [shape: f32[2,128,32], index: 0, kind: input, shape index: {}]
  %s1 = inlined_call_operand.vmem [shape: f32[2,1,128], index: 1, kind: input, shape index: {}]
  %s2 = inlined_call_operand.vmem [shape: bf16[96,32], index: 2, kind: input, shape index: {}]
  %s3 = inlined_call_operand.vmem [shape: f32[96,1], index: 3, kind: input, shape index: {}]
  %s4 = inlined_call_operand.vmem [shape: bf16[32,32], index: 4, kind: input, shape index: {}]
  %s5 = inlined_call_operand.vmem [shape: f32[1,32], index: 5, kind: input, shape index: {}]
  %s6 = inlined_call_operand.vmem [shape: bf16[32,64], index: 6, kind: input, shape index: {}]
  %s7 = inlined_call_operand.vmem [shape: f32[1,64], index: 7, kind: input, shape index: {}]
  %s8 = inlined_call_operand.vmem [shape: bf16[64,32], index: 8, kind: input, shape index: {}]
  %s9 = inlined_call_operand.vmem [shape: f32[1,32], index: 9, kind: input, shape index: {}]
  %s10 = inlined_call_operand.vmem [shape: f32[2,128,32], index: 10, kind: output, shape index: {}]
  %s11 = sld [smem:[#allocation0]]
  $region84: #{tpu_custom_call.1} parent=0
    _
  %s13 = ssub.s32 1, %s11
  %s14 = scalar_select 0, %s13, %s11
  loop: start=0, step=1, limit=4
  $region2: #{tpu_custom_call.1} parent=0 // loop_pre_header
    _
  $region3: #{tpu_custom_call.1} parent=0 // loop_header
    %s16 = sphi 0, %s20
    %p17 = scmp.ge.s32.totalorder %s16, 4
    %s23 = sphi 0, %s35
    %s24 = sphi 0, %s31
    %s25 = sphi 0, %s23
    %s26 = sphi 0, %s24
    %s27 = sphi 0, %s25
    %s28 = sphi 0, %s26
    %s38 = sphi 0, %s40
    %s41 = sphi 0, %s38
    %s42 = sphi 0, %s41
    %s58 = sphi 0, %s42
    %s64 = sphi 0, %s66
    %s67 = sphi 0, %s64
    %s68 = sphi 0, %s67
    %s84 = sphi 0, %s68
    %s88 = sphi 0, %s88
    %s90 = sphi 0, %s88
    %s91 = sphi 0, %s90
    %s105 = sphi 0, %s91
    %s109 = sphi 0, %s109
    %s111 = sphi 0, %s109
    %s112 = sphi 0, %s111
    %s126 = sphi 0, %s112
    %s130 = sphi 0, %s130
    %s132 = sphi 0, %s130
    %s133 = sphi 0, %s132
    %s147 = sphi 0, %s133
    %s151 = sphi 0, %s151
    %s153 = sphi 0, %s151
    %s154 = sphi 0, %s153
    %s168 = sphi 0, %s154
    %s172 = sphi 0, %s172
    %s174 = sphi 0, %s172
    %s175 = sphi 0, %s174
    %s189 = sphi 0, %s175
    %s193 = sphi 0, %s193
    %s195 = sphi 0, %s193
    %s196 = sphi 0, %s195
    %s210 = sphi 0, %s196
    %s214 = sphi 0, %s214
    %s216 = sphi 0, %s214
    %s217 = sphi 0, %s216
    %s231 = sphi 0, %s217
    %s235 = sphi 0, %s235
    %s237 = sphi 0, %s235
    %s238 = sphi 0, %s237
    %s252 = sphi 0, %s238
    %s260 = sphi 0, %s262
    %s263 = sphi 0, %s260
    %s264 = sphi 0, %s263
    %s280 = sphi 0, %s264
  $region4: #{tpu_custom_call.1} parent=0 // loop_header_branch
    %19 = sbr.rel (%p17) target = $region8
  $region5: #{tpu_custom_call.1} parent=0 // loop_body
    %s21 = ssub.s32 %s16, 1
    %s22 = ssub.s32 %s16, 2
    %s29 = sadd.s32 1, %s24
    %p30 = scmp.ge.s32.totalorder %s29, 1
    %s31 = scalar_select %p30, 0, %s29
    %s32 = sadd.s32 1, %s23
    %s33 = scalar_select %p30, %s32, %s23
    %p34 = scmp.ge.s32.totalorder %s33, 2
    %s35 = scalar_select %p34, 0, %s33
    %s36 = ssub.s32 %s23, %s35
    %p37 = scmp.eq.s32.totalorder %s36, 0
    %s39 = sadd.s32 %s38, 1
    %s40 = scalar_select %p37, %s38, %s39
    %p43 = pneg %p37
    %p44 = scmp.eq.s32.totalorder %s16, 1
    %p45 = por %p43, %p44
    %p46 = scmp.ne.s32.totalorder %s38, %s41
    %p47 = scmp.eq.s32.totalorder %s16, 0
    %p48 = por %p46, %p47
    %p49 = scmp.ne.s32.totalorder %s38, %s41
    %p50 = scmp.eq.s32.totalorder %s21, 1
    %p51 = por %p49, %p50
    %p52 = scmp.ne.s32.totalorder %s41, %s42
    %p53 = scmp.eq.s32.totalorder %s21, 0
    %p54 = por %p52, %p53
    %p55 = scmp.ne.s32.totalorder %s41, %s42
    %p56 = scmp.eq.s32.totalorder %s22, 1
    %p57 = por %p55, %p56
    %p59 = scmp.ne.s32.totalorder %s42, %s58
    %p60 = scmp.eq.s32.totalorder %s22, 0
    %p61 = por %p59, %p60
    %s62 = ssub.s32 %s23, %s35
    %p63 = scmp.eq.s32.totalorder %s62, 0
    %s65 = sadd.s32 %s64, 1
    %s66 = scalar_select %p63, %s64, %s65
    %p69 = pneg %p63
    %p70 = scmp.eq.s32.totalorder %s16, 1
    %p71 = por %p69, %p70
    %p72 = scmp.ne.s32.totalorder %s64, %s67
    %p73 = scmp.eq.s32.totalorder %s16, 0
    %p74 = por %p72, %p73
    %p75 = scmp.ne.s32.totalorder %s64, %s67
    %p76 = scmp.eq.s32.totalorder %s21, 1
    %p77 = por %p75, %p76
    %p78 = scmp.ne.s32.totalorder %s67, %s68
    %p79 = scmp.eq.s32.totalorder %s21, 0
    %p80 = por %p78, %p79
    %p81 = scmp.ne.s32.totalorder %s67, %s68
    %p82 = scmp.eq.s32.totalorder %s22, 1
    %p83 = por %p81, %p82
    %p85 = scmp.ne.s32.totalorder %s68, %s84
    %p86 = scmp.eq.s32.totalorder %s22, 0
    %p87 = por %p85, %p86
    %s89 = sadd.s32 %s88, 1
    %p92 = scmp.eq.s32.totalorder %s16, 1
    %p93 = scmp.ne.s32.totalorder %s88, %s90
    %p94 = scmp.eq.s32.totalorder %s16, 0
    %p95 = por %p93, %p94
    %p96 = scmp.ne.s32.totalorder %s88, %s90
    %p97 = scmp.eq.s32.totalorder %s21, 1
    %p98 = por %p96, %p97
    %p99 = scmp.ne.s32.totalorder %s90, %s91
    %p100 = scmp.eq.s32.totalorder %s21, 0
    %p101 = por %p99, %p100
    %p102 = scmp.ne.s32.totalorder %s90, %s91
    %p103 = scmp.eq.s32.totalorder %s22, 1
    %p104 = por %p102, %p103
    %p106 = scmp.ne.s32.totalorder %s91, %s105
    %p107 = scmp.eq.s32.totalorder %s22, 0
    %p108 = por %p106, %p107
    %s110 = sadd.s32 %s109, 1
    %p113 = scmp.eq.s32.totalorder %s16, 1
    %p114 = scmp.ne.s32.totalorder %s109, %s111
    %p115 = scmp.eq.s32.totalorder %s16, 0
    %p116 = por %p114, %p115
    %p117 = scmp.ne.s32.totalorder %s109, %s111
    %p118 = scmp.eq.s32.totalorder %s21, 1
    %p119 = por %p117, %p118
    %p120 = scmp.ne.s32.totalorder %s111, %s112
    %p121 = scmp.eq.s32.totalorder %s21, 0
    %p122 = por %p120, %p121
    %p123 = scmp.ne.s32.totalorder %s111, %s112
    %p124 = scmp.eq.s32.totalorder %s22, 1
    %p125 = por %p123, %p124
    %p127 = scmp.ne.s32.totalorder %s112, %s126
    %p128 = scmp.eq.s32.totalorder %s22, 0
    %p129 = por %p127, %p128
    %s131 = sadd.s32 %s130, 1
    %p134 = scmp.eq.s32.totalorder %s16, 1
    %p135 = scmp.ne.s32.totalorder %s130, %s132
    %p136 = scmp.eq.s32.totalorder %s16, 0
    %p137 = por %p135, %p136
    %p138 = scmp.ne.s32.totalorder %s130, %s132
    %p139 = scmp.eq.s32.totalorder %s21, 1
    %p140 = por %p138, %p139
    %p141 = scmp.ne.s32.totalorder %s132, %s133
    %p142 = scmp.eq.s32.totalorder %s21, 0
    %p143 = por %p141, %p142
    %p144 = scmp.ne.s32.totalorder %s132, %s133
    %p145 = scmp.eq.s32.totalorder %s22, 1
    %p146 = por %p144, %p145
    %p148 = scmp.ne.s32.totalorder %s133, %s147
    %p149 = scmp.eq.s32.totalorder %s22, 0
    %p150 = por %p148, %p149
    %s152 = sadd.s32 %s151, 1
    %p155 = scmp.eq.s32.totalorder %s16, 1
    %p156 = scmp.ne.s32.totalorder %s151, %s153
    %p157 = scmp.eq.s32.totalorder %s16, 0
    %p158 = por %p156, %p157
    %p159 = scmp.ne.s32.totalorder %s151, %s153
    %p160 = scmp.eq.s32.totalorder %s21, 1
    %p161 = por %p159, %p160
    %p162 = scmp.ne.s32.totalorder %s153, %s154
    %p163 = scmp.eq.s32.totalorder %s21, 0
    %p164 = por %p162, %p163
    %p165 = scmp.ne.s32.totalorder %s153, %s154
    %p166 = scmp.eq.s32.totalorder %s22, 1
    %p167 = por %p165, %p166
    %p169 = scmp.ne.s32.totalorder %s154, %s168
    %p170 = scmp.eq.s32.totalorder %s22, 0
    %p171 = por %p169, %p170
    %s173 = sadd.s32 %s172, 1
    %p176 = scmp.eq.s32.totalorder %s16, 1
    %p177 = scmp.ne.s32.totalorder %s172, %s174
    %p178 = scmp.eq.s32.totalorder %s16, 0
    %p179 = por %p177, %p178
    %p180 = scmp.ne.s32.totalorder %s172, %s174
    %p181 = scmp.eq.s32.totalorder %s21, 1
    %p182 = por %p180, %p181
    %p183 = scmp.ne.s32.totalorder %s174, %s175
    %p184 = scmp.eq.s32.totalorder %s21, 0
    %p185 = por %p183, %p184
    %p186 = scmp.ne.s32.totalorder %s174, %s175
    %p187 = scmp.eq.s32.totalorder %s22, 1
    %p188 = por %p186, %p187
    %p190 = scmp.ne.s32.totalorder %s175, %s189
    %p191 = scmp.eq.s32.totalorder %s22, 0
    %p192 = por %p190, %p191
    %s194 = sadd.s32 %s193, 1
    %p197 = scmp.eq.s32.totalorder %s16, 1
    %p198 = scmp.ne.s32.totalorder %s193, %s195
    %p199 = scmp.eq.s32.totalorder %s16, 0
    %p200 = por %p198, %p199
    %p201 = scmp.ne.s32.totalorder %s193, %s195
    %p202 = scmp.eq.s32.totalorder %s21, 1
    %p203 = por %p201, %p202
    %p204 = scmp.ne.s32.totalorder %s195, %s196
    %p205 = scmp.eq.s32.totalorder %s21, 0
    %p206 = por %p204, %p205
    %p207 = scmp.ne.s32.totalorder %s195, %s196
    %p208 = scmp.eq.s32.totalorder %s22, 1
    %p209 = por %p207, %p208
    %p211 = scmp.ne.s32.totalorder %s196, %s210
    %p212 = scmp.eq.s32.totalorder %s22, 0
    %p213 = por %p211, %p212
    %s215 = sadd.s32 %s214, 1
    %p218 = scmp.eq.s32.totalorder %s16, 1
    %p219 = scmp.ne.s32.totalorder %s214, %s216
    %p220 = scmp.eq.s32.totalorder %s16, 0
    %p221 = por %p219, %p220
    %p222 = scmp.ne.s32.totalorder %s214, %s216
    %p223 = scmp.eq.s32.totalorder %s21, 1
    %p224 = por %p222, %p223
    %p225 = scmp.ne.s32.totalorder %s216, %s217
    %p226 = scmp.eq.s32.totalorder %s21, 0
    %p227 = por %p225, %p226
    %p228 = scmp.ne.s32.totalorder %s216, %s217
    %p229 = scmp.eq.s32.totalorder %s22, 1
    %p230 = por %p228, %p229
    %p232 = scmp.ne.s32.totalorder %s217, %s231
    %p233 = scmp.eq.s32.totalorder %s22, 0
    %p234 = por %p232, %p233
    %s236 = sadd.s32 %s235, 1
    %p239 = scmp.eq.s32.totalorder %s16, 1
    %p240 = scmp.ne.s32.totalorder %s235, %s237
    %p241 = scmp.eq.s32.totalorder %s16, 0
    %p242 = por %p240, %p241
    %p243 = scmp.ne.s32.totalorder %s235, %s237
    %p244 = scmp.eq.s32.totalorder %s21, 1
    %p245 = por %p243, %p244
    %p246 = scmp.ne.s32.totalorder %s237, %s238
    %p247 = scmp.eq.s32.totalorder %s21, 0
    %p248 = por %p246, %p247
    %p249 = scmp.ne.s32.totalorder %s237, %s238
    %p250 = scmp.eq.s32.totalorder %s22, 1
    %p251 = por %p249, %p250
    %p253 = scmp.ne.s32.totalorder %s238, %s252
    %p254 = scmp.eq.s32.totalorder %s22, 0
    %p255 = por %p253, %p254
    %s256 = ssub.s32 %s23, %s35
    %s257 = ssub.s32 %s24, %s31
    %s258 = sor.u32 %s256, %s257
    %p259 = scmp.eq.s32.totalorder %s258, 0
    %s261 = sadd.s32 %s260, 1
    %s262 = scalar_select %p259, %s260, %s261
    %p265 = pneg %p259
    %p266 = scmp.eq.s32.totalorder %s16, 1
    %p267 = por %p265, %p266
    %p268 = scmp.ne.s32.totalorder %s260, %s263
    %p269 = scmp.eq.s32.totalorder %s16, 0
    %p270 = por %p268, %p269
    %p271 = scmp.ne.s32.totalorder %s260, %s263
    %p272 = scmp.eq.s32.totalorder %s21, 1
    %p273 = por %p271, %p272
    %p274 = scmp.ne.s32.totalorder %s263, %s264
    %p275 = scmp.eq.s32.totalorder %s21, 0
    %p276 = por %p274, %p275
    %p277 = scmp.ne.s32.totalorder %s263, %s264
    %p278 = scmp.eq.s32.totalorder %s22, 1
    %p279 = por %p277, %p278
    %p281 = scmp.ne.s32.totalorder %s264, %s280
    %p282 = scmp.eq.s32.totalorder %s22, 0
    %p283 = por %p281, %p282
    %p284 = scmp.le.s32.totalorder 1, %s16
    %p285 = scmp.lt.s32.totalorder %s16, 3
    %p286 = pnand %p284, %p285
    %p287 = pneg %p286
    // Predicated region
    $region9: #{tpu_custom_call.1} parent=5 // pred_check
      _
    $region10: #{tpu_custom_call.1} parent=5 // pred_check_branch
      %289 = sbr.rel (%p286) target = $region12
    $region11: #{tpu_custom_call.1} parent=5 // pred_region
      %s290 = ssub.s32 %s16, 1
      // Predicated region
      $region13: #{tpu_custom_call.1} parent=11 // pred_check
        %p291 = pneg %p101
      $region14: #{tpu_custom_call.1} parent=11 // pred_check_branch
        %293 = sbr.rel (%p291) target = $region16
      $region15: #{tpu_custom_call.1} parent=11 // pred_region
        _
      $region16: #{tpu_custom_call.1} parent=11 // pred_fallthru
        _
      // Predicated region
      $region17: #{tpu_custom_call.1} parent=11 // pred_check
        %p294 = pneg %p122
      $region18: #{tpu_custom_call.1} parent=11 // pred_check_branch
        %296 = sbr.rel (%p294) target = $region20
      $region19: #{tpu_custom_call.1} parent=11 // pred_region
        _
      $region20: #{tpu_custom_call.1} parent=11 // pred_fallthru
        _
      // Predicated region
      $region21: #{tpu_custom_call.1} parent=11 // pred_check
        %p297 = pneg %p143
      $region22: #{tpu_custom_call.1} parent=11 // pred_check_branch
        %299 = sbr.rel (%p297) target = $region24
      $region23: #{tpu_custom_call.1} parent=11 // pred_region
        _
      $region24: #{tpu_custom_call.1} parent=11 // pred_fallthru
        _
      // Predicated region
      $region25: #{tpu_custom_call.1} parent=11 // pred_check
        %p300 = pneg %p164
      $region26: #{tpu_custom_call.1} parent=11 // pred_check_branch
        %302 = sbr.rel (%p300) target = $region28
      $region27: #{tpu_custom_call.1} parent=11 // pred_region
        _
      $region28: #{tpu_custom_call.1} parent=11 // pred_fallthru
        _
      // Predicated region
      $region29: #{tpu_custom_call.1} parent=11 // pred_check
        %p303 = pneg %p185
      $region30: #{tpu_custom_call.1} parent=11 // pred_check_branch
        %305 = sbr.rel (%p303) target = $region32
      $region31: #{tpu_custom_call.1} parent=11 // pred_region
        _
      $region32: #{tpu_custom_call.1} parent=11 // pred_fallthru
        _
      // Predicated region
      $region33: #{tpu_custom_call.1} parent=11 // pred_check
        %p306 = pneg %p206
      $region34: #{tpu_custom_call.1} parent=11 // pred_check_branch
        %308 = sbr.rel (%p306) target = $region36
      $region35: #{tpu_custom_call.1} parent=11 // pred_region
        _
      $region36: #{tpu_custom_call.1} parent=11 // pred_fallthru
        _
      // Predicated region
      $region37: #{tpu_custom_call.1} parent=11 // pred_check
        %p309 = pneg %p227
      $region38: #{tpu_custom_call.1} parent=11 // pred_check_branch
        %311 = sbr.rel (%p309) target = $region40
      $region39: #{tpu_custom_call.1} parent=11 // pred_region
        _
      $region40: #{tpu_custom_call.1} parent=11 // pred_fallthru
        _
      // Predicated region
      $region41: #{tpu_custom_call.1} parent=11 // pred_check
        %p312 = pneg %p248
      $region42: #{tpu_custom_call.1} parent=11 // pred_check_branch
        %314 = sbr.rel (%p312) target = $region44
      $region43: #{tpu_custom_call.1} parent=11 // pred_region
        _
      $region44: #{tpu_custom_call.1} parent=11 // pred_fallthru
        _
    $region12: #{tpu_custom_call.1} parent=5 // pred_fallthru
      _
    %p315 = scmp.lt.s32.totalorder %s16, 2
    // Predicated region
    $region45: #{tpu_custom_call.1} parent=5 // pred_check
      %p316 = pneg %p315
    $region46: #{tpu_custom_call.1} parent=5 // pred_check_branch
      %318 = sbr.rel (%p316) target = $region48
    $region47: #{tpu_custom_call.1} parent=5 // pred_region
      // Predicated region
      $region49: #{tpu_custom_call.1} parent=47 // pred_check
        %p319 = pneg %p48
      $region50: #{tpu_custom_call.1} parent=47 // pred_check_branch
        %321 = sbr.rel (%p319) target = $region52
      $region51: #{tpu_custom_call.1} parent=47 // pred_region
        %p322 = scmp.lt.s32.totalorder %s23, 1
        %s323 = scalar_select %p322, %s23, 1
        %s324 = smul.addr %s323, 16
        %s325 = smul.addr %s324, 8
        %s326 = scalar_lea.vmem %s0, %s325
      $region52: #{tpu_custom_call.1} parent=47 // pred_fallthru
        _
      // Predicated region
      $region53: #{tpu_custom_call.1} parent=47 // pred_check
        %p327 = pneg %p74
      $region54: #{tpu_custom_call.1} parent=47 // pred_check_branch
        %329 = sbr.rel (%p327) target = $region56
      $region55: #{tpu_custom_call.1} parent=47 // pred_region
        %p330 = scmp.lt.s32.totalorder %s23, 1
        %s331 = scalar_select %p330, %s23, 1
        %s332 = scalar_lea.vmem %s1, %s331
      $region56: #{tpu_custom_call.1} parent=47 // pred_fallthru
        _
    $region48: #{tpu_custom_call.1} parent=5 // pred_fallthru
      _
    %p333 = scmp.le.s32.totalorder 1, %s16
    %p334 = scmp.lt.s32.totalorder %s16, 3
    %p335 = pnand %p333, %p334
    %p336 = pneg %p335
    // Predicated region
    $region57: #{tpu_custom_call.1} parent=5 // pred_check
      _
    $region58: #{tpu_custom_call.1} parent=5 // pred_check_branch
      %338 = sbr.rel (%p335) target = $region60
    $region59: #{tpu_custom_call.1} parent=5 // pred_region
      %s339 = ssub.s32 %s16, 1
      %p340 = scmp.lt.s32.totalorder %s25, 1
      %s341 = scalar_select %p340, %s25, 1
      %s342 = smul.addr %s341, 16
      %s343 = smul.addr %s342, 8
      %s344 = scalar_lea.vmem %s0, %s343
      %p345 = pneg %p54
      %p346 = pneg %p51
      %p347 = scmp.lt.s32.totalorder %s25, 1
      %s348 = scalar_select %p347, %s25, 1
      %s349 = scalar_lea.vmem %s1, %s348
      %p350 = pneg %p80
      %p351 = pneg %p77
      %p352 = pneg %p101
      %p353 = pneg %p98
      %p354 = pneg %p122
      %p355 = pneg %p119
      %p356 = pneg %p143
      %p357 = pneg %p140
      %p358 = pneg %p164
      %p359 = pneg %p161
      %p360 = pneg %p185
      %p361 = pneg %p182
      %p362 = pneg %p206
      %p363 = pneg %p203
      %p364 = pneg %p227
      %p365 = pneg %p224
      %p366 = pneg %p248
      %p367 = pneg %p245
      %p368 = pneg %p276
      %p369 = pneg %p273
      %s370 = smul.u32 16, %s26
      %p371 = scmp.lt.s32.totalorder %s25, 1
      %s372 = scalar_select %p371, %s25, 1
      %p373 = scmp.lt.s32.totalorder %s370, 15
      %s374 = scalar_select %p373, %s370, 15
      %s375 = smul.addr %s372, 16
      %s376 = sadd.s32 %s374, %s375
      %s377 = smul.addr %s376, 8
      %s378 = scalar_lea.vmem %s10, %s377
      %p379 = scmp.lt.s32.totalorder %s25, 1
      %s380 = scalar_select %p379, %s25, 1
      %s381 = smul.addr %s380, 16
      %s382 = smul.addr %s381, 8
      %s383 = scalar_lea.vmem %s0, %s382
      %p384 = scmp.lt.s32.totalorder %s25, 1
      %s385 = scalar_select %p384, %s25, 1
      %s386 = scalar_lea.vmem %s1, %s385
      %s387 = smul.u32 16, %s26
      %p388 = scmp.lt.s32.totalorder %s25, 1
      %s389 = scalar_select %p388, %s25, 1
      %p390 = scmp.lt.s32.totalorder %s387, 15
      %s391 = scalar_select %p390, %s387, 15
      %s392 = smul.addr %s389, 16
      %s393 = sadd.s32 %s391, %s392
      %s394 = smul.addr %s393, 8
      %s395 = scalar_lea.vmem %s10, %s394
      %s396 = smul.u32 16, %s26
      %p398 = scmp.eq.s32.totalorder %s26, 0
      // Predicated region
      $region61: #{tpu_custom_call.1} parent=59 // pred_check
        %p399 = pneg %p398
      $region62: #{tpu_custom_call.1} parent=59 // pred_check_branch
        %401 = sbr.rel (%p399) target = $region64
      $region63: #{tpu_custom_call.1} parent=59 // pred_region
        %v402 = vld [vmem:[%s383] sm:$0xff]
        %v403 = vld [vmem:[%s383 + $0x8] sm:$0xff]
        %v404 = vld [vmem:[%s383 + $0x10] sm:$0xff]
        %v405 = vld [vmem:[%s383 + $0x18] sm:$0xff]
        %v406 = vld [vmem:[%s383 + $0x20] sm:$0xff]
        %v407 = vld [vmem:[%s383 + $0x28] sm:$0xff]
        %v408 = vld [vmem:[%s383 + $0x30] sm:$0xff]
        %v409 = vld [vmem:[%s383 + $0x38] sm:$0xff]
        %v410 = vld [vmem:[%s383 + $0x40] sm:$0xff]
        %v411 = vld [vmem:[%s383 + $0x48] sm:$0xff]
        %v412 = vld [vmem:[%s383 + $0x50] sm:$0xff]
        %v413 = vld [vmem:[%s383 + $0x58] sm:$0xff]
        %v414 = vld [vmem:[%s383 + $0x60] sm:$0xff]
        %v415 = vld [vmem:[%s383 + $0x68] sm:$0xff]
        %v416 = vld [vmem:[%s383 + $0x70] sm:$0xff]
        %v417 = vld [vmem:[%s383 + $0x78] sm:$0xff]
        %v418 = vpack.c.bf16 %v403, %v402
        %v419 = vpack.c.bf16 %v405, %v404
        %v420 = vpack.c.bf16 %v407, %v406
        %v421 = vpack.c.bf16 %v409, %v408
        %v422 = vpack.c.bf16 %v411, %v410
        %v423 = vpack.c.bf16 %v413, %v412
        %v424 = vpack.c.bf16 %v415, %v414
        %v425 = vpack.c.bf16 %v417, %v416
        %v426 = vld [vmem:[%s2] sm:$0xf]
        %v427 = vld [vmem:[%s2 + $0x4] sm:$0xf]
        %v428 = vld [vmem:[%s2 + $0x8] sm:$0xf]
        %v429 = vld [vmem:[%s2 + $0xc] sm:$0xf]
        %v430 = vld [vmem:[%s2 + $0x10] sm:$0xf]
        %v431 = vld [vmem:[%s2 + $0x14] sm:$0xf]
        %v432 = vld [vmem:[%s2 + $0x18] sm:$0xf]
        %v433 = vld [vmem:[%s2 + $0x1c] sm:$0xf]
        %v434 = vld [vmem:[%s2 + $0x20] sm:$0xf]
        %v435 = vld [vmem:[%s2 + $0x24] sm:$0xf]
        %v436 = vld [vmem:[%s2 + $0x28] sm:$0xf]
        %v437 = vld [vmem:[%s2 + $0x2c] sm:$0xf]
        %v438 = vld [vmem:[%s3] sm:$0xff]
        %v439 = vld [vmem:[%s3 + $0x8] sm:$0xff]
        %v440 = vld [vmem:[%s3 + $0x10] sm:$0xff]
        %v441 = vld [vmem:[%s3 + $0x18] sm:$0xff]
        %v442 = vld [vmem:[%s3 + $0x20] sm:$0xff]
        %v443 = vld [vmem:[%s3 + $0x28] sm:$0xff]
        %v444 = vld [vmem:[%s3 + $0x30] sm:$0xff]
        %v445 = vld [vmem:[%s3 + $0x38] sm:$0xff]
        %v446 = vld [vmem:[%s3 + $0x40] sm:$0xff]
        %v447 = vld [vmem:[%s3 + $0x48] sm:$0xff]
        %v448 = vld [vmem:[%s3 + $0x50] sm:$0xff]
        %v449 = vld [vmem:[%s3 + $0x58] sm:$0xff]
        %451 = vset.pattern.permute.xlu0 0
        %452 = vperm.xlu0 %451, %v438
        %v453 = vpop.permute.xlu0 %452
        %456 = vset.pattern.permute.xlu0 0
        %457 = vperm.xlu0 %456, %v439
        %v458 = vpop.permute.xlu0 %457
        %461 = vset.pattern.permute.xlu0 0
        %462 = vperm.xlu0 %461, %v440
        %v463 = vpop.permute.xlu0 %462
        %466 = vset.pattern.permute.xlu0 0
        %467 = vperm.xlu0 %466, %v441
        %v468 = vpop.permute.xlu0 %467
        %471 = vset.pattern.permute.xlu0 0
        %472 = vperm.xlu0 %471, %v442
        %v473 = vpop.permute.xlu0 %472
        %476 = vset.pattern.permute.xlu0 0
        %477 = vperm.xlu0 %476, %v443
        %v478 = vpop.permute.xlu0 %477
        %481 = vset.pattern.permute.xlu0 0
        %482 = vperm.xlu0 %481, %v444
        %v483 = vpop.permute.xlu0 %482
        %486 = vset.pattern.permute.xlu0 0
        %487 = vperm.xlu0 %486, %v445
        %v488 = vpop.permute.xlu0 %487
        %491 = vset.pattern.permute.xlu0 0
        %492 = vperm.xlu0 %491, %v446
        %v493 = vpop.permute.xlu0 %492
        %496 = vset.pattern.permute.xlu0 0
        %497 = vperm.xlu0 %496, %v447
        %v498 = vpop.permute.xlu0 %497
        %501 = vset.pattern.permute.xlu0 0
        %502 = vperm.xlu0 %501, %v448
        %v503 = vpop.permute.xlu0 %502
        %506 = vset.pattern.permute.xlu0 0
        %507 = vperm.xlu0 %506, %v449
        %v508 = vpop.permute.xlu0 %507
        %v522 = vunpack.c.l.b16 %v426
        %v523 = vunpack.c.l.b16 %v427
        %v524 = vunpack.c.l.b16 %v428
        %v525 = vunpack.c.l.b16 %v429
        %v526 = vunpack.c.l.b16 %v430
        %v527 = vunpack.c.l.b16 %v431
        %v528 = vunpack.c.l.b16 %v432
        %v529 = vunpack.c.l.b16 %v433
        %v530 = vunpack.c.l.b16 %v434
        %v531 = vunpack.c.l.b16 %v435
        %v532 = vunpack.c.l.b16 %v436
        %v533 = vunpack.c.l.b16 %v437
        %v534 = vpack.c.b16 %v523, %v522
        %v535 = vpack.c.b16 %v525, %v524
        %v536 = vpack.c.b16 %v527, %v526
        %v537 = vpack.c.b16 %v529, %v528
        %v538 = vpack.c.b16 %v531, %v530
        %v539 = vpack.c.b16 %v533, %v532
        %vm540 = vcmask 261120
        %v542 = vsel %vm540, %v534, 0
        %v545 = vsel %vm540, %v535, 0
        %v548 = vsel %vm540, %v536, 0
        %v551 = vsel %vm540, %v537, 0
        %v554 = vsel %vm540, %v538, 0
        %v557 = vsel %vm540, %v539, 0
        %v560 = vsel %vm540, %v418, 0
        %v563 = vsel %vm540, %v419, 0
        %v566 = vsel %vm540, %v420, 0
        %v569 = vsel %vm540, %v421, 0
        %v572 = vsel %vm540, %v422, 0
        %v575 = vsel %vm540, %v423, 0
        %v578 = vsel %vm540, %v424, 0
        %v581 = vsel %vm540, %v425, 0
        %583 = vmatpush.bf16.xpose.msra.mxu0 %v581
        %584 = vmatpush.bf16.xpose.msra.mxu0 %v578
        %585 = vmatpush.bf16.xpose.msra.mxu0 %v575
        %586 = vmatpush.bf16.xpose.msra.mxu0 %v572
        %587 = vmatpush.bf16.xpose.msra.mxu0 %v569
        %588 = vmatpush.bf16.xpose.msra.mxu0 %v566
        %589 = vmatpush.bf16.xpose.msra.mxu0 %v563
        %590 = vmatpush.bf16.xpose.msra.mxu0 %v560
        %591 = vmatmul.bf16.gmra.mxu0 %v542
        %v592 = vpop.f32.mrf.mxu0
        %v593 = vadd.f32 %v453, %v592
        %v594 = vpop.f32.mrf.mxu0
        %v595 = vadd.f32 %v458, %v594
        %596 = vmatmul.bf16.gmra.mxu0 %v545
        %v597 = vpop.f32.mrf.mxu0
        %v598 = vadd.f32 %v463, %v597
        %v599 = vpop.f32.mrf.mxu0
        %v600 = vadd.f32 %v468, %v599
        %601 = vmatmul.bf16.gmra.mxu0 %v548
        %v602 = vpop.f32.mrf.mxu0
        %v603 = vadd.f32 %v473, %v602
        %v604 = vpop.f32.mrf.mxu0
        %v605 = vadd.f32 %v478, %v604
        %606 = vmatmul.bf16.gmra.mxu0 %v551
        %v607 = vpop.f32.mrf.mxu0
        %v608 = vadd.f32 %v483, %v607
        %v609 = vpop.f32.mrf.mxu0
        %v610 = vadd.f32 %v488, %v609
        %611 = vmatmul.bf16.gmra.mxu0 %v554
        %v612 = vpop.f32.mrf.mxu0
        %v613 = vadd.f32 %v493, %v612
        %v614 = vpop.f32.mrf.mxu0
        %v615 = vadd.f32 %v498, %v614
        %616 = vmatmul.bf16.gmra.mxu0 %v557
        %v617 = vpop.f32.mrf.mxu0
        %v618 = vadd.f32 %v503, %v617
        %v619 = vpop.f32.mrf.mxu0
        %v620 = vadd.f32 %v508, %v619
        %621 = vdwg.mxu0
        %622 = vst [vmem:[#allocation2] sm:$0xff] %v593
        %623 = vst [vmem:[#allocation2 + $0x8] sm:$0xff] %v595
        %624 = vst [vmem:[#allocation2 + $0x10] sm:$0xff] %v598
        %625 = vst [vmem:[#allocation2 + $0x18] sm:$0xff] %v600
        %626 = vst [vmem:[#allocation2 + $0x20] sm:$0xff] %v603
        %627 = vst [vmem:[#allocation2 + $0x28] sm:$0xff] %v605
        %628 = vst [vmem:[#allocation2 + $0x30] sm:$0xff] %v608
        %629 = vst [vmem:[#allocation2 + $0x38] sm:$0xff] %v610
        %630 = vst [vmem:[#allocation2 + $0x40] sm:$0xff] %v613
        %631 = vst [vmem:[#allocation2 + $0x48] sm:$0xff] %v615
        %632 = vst [vmem:[#allocation2 + $0x50] sm:$0xff] %v618
        %633 = vst [vmem:[#allocation2 + $0x58] sm:$0xff] %v620
      $region64: #{tpu_custom_call.1} parent=59 // pred_fallthru
        _
      %s634 = smul.u32 %s26, 128
      %v635 = vld [vmem:[%s386] sm:$0x1]
      loop: start=0, step=1, limit=4
      $region65: #{tpu_custom_call.1} parent=59 // loop_pre_header
        _
      $region66: #{tpu_custom_call.1} parent=59 // loop_header
        %s637 = sphi 0, %s641
        %p638 = scmp.ge.s32.totalorder %s637, 4
      $region67: #{tpu_custom_call.1} parent=59 // loop_header_branch
        %640 = sbr.rel (%p638) target = $region71
      $region68: #{tpu_custom_call.1} parent=59 // loop_body
        %s642 = smul.u32 %s637, 8
        %s643 = sshra.s32 %s634, 7
        %s644 = sand.u32 %s634, 127
        %s645 = sadd.s32 %s643, %s642
        %s646 = scalar_lea.vmem [#allocation2], %s645
        %v647 = vld [vmem:[%s646] sm:$0xff]
        %v648 = vpack.c.bf16 %v647, %v647
        %s649 = sadd.s32 %s642, 32
        %s650 = scalar_lea.vmem [#allocation2], %s649
        %v651 = vld [vmem:[%s650] sm:$0xff]
        %v652 = vpack.c.bf16 %v651, %v651
        %s653 = sadd.s32 %s642, 64
        %s654 = scalar_lea.vmem [#allocation2], %s653
        %v655 = vld [vmem:[%s654] sm:$0xff]
        %v656 = vpack.c.bf16 %v655, %v655
        %657 = vxpose.xlu0.c.b16.start [1/8] %v648, 128
        %658 = vxpose.xlu0.c.b16.cont [2/8] 0, 128
        %659 = vxpose.xlu0.c.b16.cont [3/8] 0, 128
        %660 = vxpose.xlu0.c.b16.cont [4/8] 0, 128
        %661 = vxpose.xlu0.c.b16.cont [5/8] 0, 128
        %662 = vxpose.xlu0.c.b16.cont [6/8] 0, 128
        %663 = vxpose.xlu0.c.b16.cont [7/8] 0, 128
        %664 = vxpose.xlu0.c.b16.end [8/8] 0, 128
        %v665 = vpop.trf.xlu0
        %v666 = vpop.trf.xlu0
        %v667 = vpop.trf.xlu0
        %v668 = vpop.trf.xlu0
        %v669 = vpop.trf.xlu0
        %v670 = vpop.trf.xlu0
        %v671 = vpop.trf.xlu0
        %v672 = vpop.trf.xlu0
        %vm673 = vcmask 64512
        %v675 = vsel %vm673, %v665, 0
        %v678 = vsel %vm673, %v666, 0
        %v681 = vsel %vm673, %v667, 0
        %v684 = vsel %vm673, %v668, 0
        %v687 = vsel %vm673, %v669, 0
        %v690 = vsel %vm673, %v670, 0
        %v693 = vsel %vm673, %v671, 0
        %v696 = vsel %vm673, %v672, 0
        %vm698 = vcmask 1043456
        %v700 = vsel %vm698, %v652, 0
        %702 = vmatpush.bf16.msra.mxu0 0
        %703 = vmatpush.bf16.msra.mxu0 0
        %704 = vmatpush.bf16.msra.mxu0 0
        %705 = vmatpush.bf16.msra.mxu0 0
        %706 = vmatpush.bf16.msra.mxu0 0
        %707 = vmatpush.bf16.msra.mxu0 0
        %708 = vmatpush.bf16.msra.mxu0 0
        %709 = vmatpush.bf16.msra.mxu0 %v700
        %710 = vmatmul.bf16.gmra.mxu0 %v675
        %v711 = vpop.f32.mrf.mxu0
        %v712 = vadd.f32 0.0, %v711
        %v713 = vpop.f32.mrf.mxu0
        %v714 = vadd.f32 0.0, %v713
        %715 = vmatmul.bf16.gmra.mxu0 %v678
        %v716 = vpop.f32.mrf.mxu0
        %v717 = vadd.f32 0.0, %v716
        %v718 = vpop.f32.mrf.mxu0
        %v719 = vadd.f32 0.0, %v718
        %720 = vmatmul.bf16.gmra.mxu0 %v681
        %v721 = vpop.f32.mrf.mxu0
        %v722 = vadd.f32 0.0, %v721
        %v723 = vpop.f32.mrf.mxu0
        %v724 = vadd.f32 0.0, %v723
        %725 = vmatmul.bf16.gmra.mxu0 %v684
        %v726 = vpop.f32.mrf.mxu0
        %v727 = vadd.f32 0.0, %v726
        %v728 = vpop.f32.mrf.mxu0
        %v729 = vadd.f32 0.0, %v728
        %730 = vmatmul.bf16.gmra.mxu0 %v687
        %v731 = vpop.f32.mrf.mxu0
        %v732 = vadd.f32 0.0, %v731
        %v733 = vpop.f32.mrf.mxu0
        %v734 = vadd.f32 0.0, %v733
        %735 = vmatmul.bf16.gmra.mxu0 %v690
        %v736 = vpop.f32.mrf.mxu0
        %v737 = vadd.f32 0.0, %v736
        %v738 = vpop.f32.mrf.mxu0
        %v739 = vadd.f32 0.0, %v738
        %740 = vmatmul.bf16.gmra.mxu0 %v693
        %v741 = vpop.f32.mrf.mxu0
        %v742 = vadd.f32 0.0, %v741
        %v743 = vpop.f32.mrf.mxu0
        %v744 = vadd.f32 0.0, %v743
        %745 = vmatmul.bf16.gmra.mxu0 %v696
        %v746 = vpop.f32.mrf.mxu0
        %v747 = vadd.f32 0.0, %v746
        %v748 = vpop.f32.mrf.mxu0
        %v749 = vadd.f32 0.0, %v748
        %750 = vdwg.mxu0
        %v751 = vmul.f32 %v712, 0.35355338
        %v752 = vmul.f32 %v714, 0.35355338
        %v753 = vmul.f32 %v717, 0.35355338
        %v754 = vmul.f32 %v719, 0.35355338
        %v755 = vmul.f32 %v722, 0.35355338
        %v756 = vmul.f32 %v724, 0.35355338
        %v757 = vmul.f32 %v727, 0.35355338
        %v758 = vmul.f32 %v729, 0.35355338
        %v759 = vmul.f32 %v732, 0.35355338
        %v760 = vmul.f32 %v734, 0.35355338
        %v761 = vmul.f32 %v737, 0.35355338
        %v762 = vmul.f32 %v739, 0.35355338
        %v763 = vmul.f32 %v742, 0.35355338
        %v764 = vmul.f32 %v744, 0.35355338
        %v765 = vmul.f32 %v747, 0.35355338
        %v766 = vmul.f32 %v749, 0.35355338
        %v768 = vperm.slane %v635, 0
        %v770 = vadd.f32 %v751, %v768
        %v771 = vadd.f32 %v752, %v768
        %v772 = vadd.f32 %v753, %v768
        %v773 = vadd.f32 %v754, %v768
        %v774 = vadd.f32 %v755, %v768
        %v775 = vadd.f32 %v756, %v768
        %v776 = vadd.f32 %v757, %v768
        %v777 = vadd.f32 %v758, %v768
        %v778 = vadd.f32 %v759, %v768
        %v779 = vadd.f32 %v760, %v768
        %v780 = vadd.f32 %v761, %v768
        %v781 = vadd.f32 %v762, %v768
        %v782 = vadd.f32 %v763, %v768
        %v783 = vadd.f32 %v764, %v768
        %v784 = vadd.f32 %v765, %v768
        %v785 = vadd.f32 %v766, %v768
        %786 = vmax.xlane.f32.xlu0 %v770
        %v787 = vpop.xlane.xlu0 %786
        %788 = vmax.xlane.f32.xlu0 %v771
        %v789 = vpop.xlane.xlu0 %788
        %790 = vmax.xlane.f32.xlu0 %v772
        %v791 = vpop.xlane.xlu0 %790
        %792 = vmax.xlane.f32.xlu0 %v773
        %v793 = vpop.xlane.xlu0 %792
        %794 = vmax.xlane.f32.xlu0 %v774
        %v795 = vpop.xlane.xlu0 %794
        %796 = vmax.xlane.f32.xlu0 %v775
        %v797 = vpop.xlane.xlu0 %796
        %798 = vmax.xlane.f32.xlu0 %v776
        %v799 = vpop.xlane.xlu0 %798
        %800 = vmax.xlane.f32.xlu0 %v777
        %v801 = vpop.xlane.xlu0 %800
        %802 = vmax.xlane.f32.xlu0 %v778
        %v803 = vpop.xlane.xlu0 %802
        %804 = vmax.xlane.f32.xlu0 %v779
        %v805 = vpop.xlane.xlu0 %804
        %806 = vmax.xlane.f32.xlu0 %v780
        %v807 = vpop.xlane.xlu0 %806
        %808 = vmax.xlane.f32.xlu0 %v781
        %v809 = vpop.xlane.xlu0 %808
        %810 = vmax.xlane.f32.xlu0 %v782
        %v811 = vpop.xlane.xlu0 %810
        %812 = vmax.xlane.f32.xlu0 %v783
        %v813 = vpop.xlane.xlu0 %812
        %814 = vmax.xlane.f32.xlu0 %v784
        %v815 = vpop.xlane.xlu0 %814
        %816 = vmax.xlane.f32.xlu0 %v785
        %v817 = vpop.xlane.xlu0 %816
        %v818 = vsub.f32 %v770, %v787
        %v819 = vsub.f32 %v771, %v789
        %v820 = vsub.f32 %v772, %v791
        %v821 = vsub.f32 %v773, %v793
        %v822 = vsub.f32 %v774, %v795
        %v823 = vsub.f32 %v775, %v797
        %v824 = vsub.f32 %v776, %v799
        %v825 = vsub.f32 %v777, %v801
        %v826 = vsub.f32 %v778, %v803
        %v827 = vsub.f32 %v779, %v805
        %v828 = vsub.f32 %v780, %v807
        %v829 = vsub.f32 %v781, %v809
        %v830 = vsub.f32 %v782, %v811
        %v831 = vsub.f32 %v783, %v813
        %v832 = vsub.f32 %v784, %v815
        %v833 = vsub.f32 %v785, %v817
        %v834 = vmul.f32 %v818, 1.442695
        %v835 = vpow.pop %v834
        %v836 = vmul.f32 %v819, 1.442695
        %v837 = vpow.pop %v836
        %v838 = vmul.f32 %v820, 1.442695
        %v839 = vpow.pop %v838
        %v840 = vmul.f32 %v821, 1.442695
        %v841 = vpow.pop %v840
        %v842 = vmul.f32 %v822, 1.442695
        %v843 = vpow.pop %v842
        %v844 = vmul.f32 %v823, 1.442695
        %v845 = vpow.pop %v844
        %v846 = vmul.f32 %v824, 1.442695
        %v847 = vpow.pop %v846
        %v848 = vmul.f32 %v825, 1.442695
        %v849 = vpow.pop %v848
        %v850 = vmul.f32 %v826, 1.442695
        %v851 = vpow.pop %v850
        %v852 = vmul.f32 %v827, 1.442695
        %v853 = vpow.pop %v852
        %v854 = vmul.f32 %v828, 1.442695
        %v855 = vpow.pop %v854
        %v856 = vmul.f32 %v829, 1.442695
        %v857 = vpow.pop %v856
        %v858 = vmul.f32 %v830, 1.442695
        %v859 = vpow.pop %v858
        %v860 = vmul.f32 %v831, 1.442695
        %v861 = vpow.pop %v860
        %v862 = vmul.f32 %v832, 1.442695
        %v863 = vpow.pop %v862
        %v864 = vmul.f32 %v833, 1.442695
        %v865 = vpow.pop %v864
        %866 = vadd.xlane.f32.xlu0 %v835
        %v867 = vpop.xlane.xlu0 %866
        %868 = vadd.xlane.f32.xlu0 %v837
        %v869 = vpop.xlane.xlu0 %868
        %870 = vadd.xlane.f32.xlu0 %v839
        %v871 = vpop.xlane.xlu0 %870
        %872 = vadd.xlane.f32.xlu0 %v841
        %v873 = vpop.xlane.xlu0 %872
        %874 = vadd.xlane.f32.xlu0 %v843
        %v875 = vpop.xlane.xlu0 %874
        %876 = vadd.xlane.f32.xlu0 %v845
        %v877 = vpop.xlane.xlu0 %876
        %878 = vadd.xlane.f32.xlu0 %v847
        %v879 = vpop.xlane.xlu0 %878
        %880 = vadd.xlane.f32.xlu0 %v849
        %v881 = vpop.xlane.xlu0 %880
        %882 = vadd.xlane.f32.xlu0 %v851
        %v883 = vpop.xlane.xlu0 %882
        %884 = vadd.xlane.f32.xlu0 %v853
        %v885 = vpop.xlane.xlu0 %884
        %886 = vadd.xlane.f32.xlu0 %v855
        %v887 = vpop.xlane.xlu0 %886
        %888 = vadd.xlane.f32.xlu0 %v857
        %v889 = vpop.xlane.xlu0 %888
        %890 = vadd.xlane.f32.xlu0 %v859
        %v891 = vpop.xlane.xlu0 %890
        %892 = vadd.xlane.f32.xlu0 %v861
        %v893 = vpop.xlane.xlu0 %892
        %894 = vadd.xlane.f32.xlu0 %v863
        %v895 = vpop.xlane.xlu0 %894
        %896 = vadd.xlane.f32.xlu0 %v865
        %v897 = vpop.xlane.xlu0 %896
        %v898 = vrcp.pop %v867
        %v899 = vrcp.pop %v869
        %v900 = vrcp.pop %v871
        %v901 = vrcp.pop %v873
        %v902 = vrcp.pop %v875
        %v903 = vrcp.pop %v877
        %v904 = vrcp.pop %v879
        %v905 = vrcp.pop %v881
        %v906 = vrcp.pop %v883
        %v907 = vrcp.pop %v885
        %v908 = vrcp.pop %v887
        %v909 = vrcp.pop %v889
        %v910 = vrcp.pop %v891
        %v911 = vrcp.pop %v893
        %v912 = vrcp.pop %v895
        %v913 = vrcp.pop %v897
        %v914 = vmul.f32 %v835, %v898
        %v915 = vmul.f32 %v837, %v899
        %v916 = vmul.f32 %v839, %v900
        %v917 = vmul.f32 %v841, %v901
        %v918 = vmul.f32 %v843, %v902
        %v919 = vmul.f32 %v845, %v903
        %v920 = vmul.f32 %v847, %v904
        %v921 = vmul.f32 %v849, %v905
        %v922 = vmul.f32 %v851, %v906
        %v923 = vmul.f32 %v853, %v907
        %v924 = vmul.f32 %v855, %v908
        %v925 = vmul.f32 %v857, %v909
        %v926 = vmul.f32 %v859, %v910
        %v927 = vmul.f32 %v861, %v911
        %v928 = vmul.f32 %v863, %v912
        %v929 = vmul.f32 %v865, %v913
        %v930 = vpack.c.bf16 %v915, %v914
        %v931 = vpack.c.bf16 %v917, %v916
        %v932 = vpack.c.bf16 %v919, %v918
        %v933 = vpack.c.bf16 %v921, %v920
        %v934 = vpack.c.bf16 %v923, %v922
        %v935 = vpack.c.bf16 %v925, %v924
        %v936 = vpack.c.bf16 %v927, %v926
        %v937 = vpack.c.bf16 %v929, %v928
        %938 = vmatpush.bf16.xpose.msra.mxu0 %v937
        %939 = vmatpush.bf16.xpose.msra.mxu0 %v936
        %940 = vmatpush.bf16.xpose.msra.mxu0 %v935
        %941 = vmatpush.bf16.xpose.msra.mxu0 %v934
        %942 = vmatpush.bf16.xpose.msra.mxu0 %v933
        %943 = vmatpush.bf16.xpose.msra.mxu0 %v932
        %944 = vmatpush.bf16.xpose.msra.mxu0 %v931
        %945 = vmatpush.bf16.xpose.msra.mxu0 %v930
        %946 = vmatmul.bf16.gmra.mxu0 %v656
        %v947 = vpop.f32.mrf.mxu0
        %v948 = vadd.f32 0.0, %v947
        %v949 = vpop.f32.mrf.mxu0
        %950 = vdwg.mxu0
        %s951 = scalar_lea.vmem [#allocation3], %s642
        %952 = vst [vmem:[%s951] sm:$0xff] %v948
      $region69: #{tpu_custom_call.1} parent=59 // loop_footer
        %s641 = sadd.s32 1, %s637
      $region70: #{tpu_custom_call.1} parent=59 // loop_footer_branch
        %636 = sbr.rel target = $region66
      $region71: #{tpu_custom_call.1} parent=59 // loop_exit
        _
      %v953 = vld [vmem:[#allocation3] sm:$0xff]
      %v954 = vld [vmem:[#allocation3 + $0x8] sm:$0xff]
      %v955 = vld [vmem:[#allocation3 + $0x10] sm:$0xff]
      %v956 = vld [vmem:[#allocation3 + $0x18] sm:$0xff]
      %v957 = vpack.c.bf16 %v954, %v953
      %v958 = vpack.c.bf16 %v956, %v955
      %959 = vxpose.xlu0.c.b16.start [1/8] %v957, 128
      %960 = vxpose.xlu0.c.b16.cont [2/8] %v958, 128
      %961 = vxpose.xlu0.c.b16.cont [3/8] 0, 128
      %962 = vxpose.xlu0.c.b16.cont [4/8] 0, 128
      %963 = vxpose.xlu0.c.b16.cont [5/8] 0, 128
      %964 = vxpose.xlu0.c.b16.cont [6/8] 0, 128
      %965 = vxpose.xlu0.c.b16.cont [7/8] 0, 128
      %966 = vxpose.xlu0.c.b16.end [8/8] 0, 128
      %v967 = vpop.trf.xlu0
      %v968 = vpop.trf.xlu0
      %v969 = vpop.trf.xlu0
      %v970 = vpop.trf.xlu0
      %v971 = vpop.trf.xlu0
      %v972 = vpop.trf.xlu0
      %v973 = vpop.trf.xlu0
      %v974 = vpop.trf.xlu0
      %v975 = vld [vmem:[%s4] sm:$0xf]
      %v976 = vld [vmem:[%s4 + $0x4] sm:$0xf]
      %v977 = vld [vmem:[%s4 + $0x8] sm:$0xf]
      %v978 = vld [vmem:[%s4 + $0xc] sm:$0xf]
      %v979 = vld [vmem:[%s5] sm:$0x1]
      %v981 = vperm.slane %v979, 0
      %v987 = vunpack.c.l.b16 %v975
      %v988 = vunpack.c.l.b16 %v976
      %v989 = vunpack.c.l.b16 %v977
      %v990 = vunpack.c.l.b16 %v978
      %v991 = vpack.c.b16 %v988, %v987
      %v992 = vpack.c.b16 %v990, %v989
      %vm995 = vcmask 261120
      %v997 = vsel %vm995, %v967, 0
      %v1000 = vsel %vm995, %v968, 0
      %v1003 = vsel %vm995, %v969, 0
      %v1006 = vsel %vm995, %v970, 0
      %v1009 = vsel %vm995, %v971, 0
      %v1012 = vsel %vm995, %v972, 0
      %v1015 = vsel %vm995, %v973, 0
      %v1018 = vsel %vm995, %v974, 0
      %1020 = vmatpush.bf16.msra.mxu0 0
      %1021 = vmatpush.bf16.msra.mxu0 0
      %1022 = vmatpush.bf16.msra.mxu0 0
      %1023 = vmatpush.bf16.msra.mxu0 0
      %1024 = vmatpush.bf16.msra.mxu0 0
      %1025 = vmatpush.bf16.msra.mxu0 0
      %1026 = vmatpush.bf16.msra.mxu0 %v992
      %1027 = vmatpush.bf16.msra.mxu0 %v991
      %1028 = vmatmul.bf16.gmra.mxu0 %v997
      %v1029 = vpop.f32.mrf.mxu0
      %v1030 = vadd.f32 %v981, %v1029
      %v1031 = vpop.f32.mrf.mxu0
      %v1032 = vadd.f32 %v981, %v1031
      %1033 = vmatmul.bf16.gmra.mxu0 %v1000
      %v1034 = vpop.f32.mrf.mxu0
      %v1035 = vadd.f32 %v981, %v1034
      %v1036 = vpop.f32.mrf.mxu0
      %v1037 = vadd.f32 %v981, %v1036
      %1038 = vmatmul.bf16.gmra.mxu0 %v1003
      %v1039 = vpop.f32.mrf.mxu0
      %v1040 = vadd.f32 %v981, %v1039
      %v1041 = vpop.f32.mrf.mxu0
      %v1042 = vadd.f32 %v981, %v1041
      %1043 = vmatmul.bf16.gmra.mxu0 %v1006
      %v1044 = vpop.f32.mrf.mxu0
      %v1045 = vadd.f32 %v981, %v1044
      %v1046 = vpop.f32.mrf.mxu0
      %v1047 = vadd.f32 %v981, %v1046
      %1048 = vmatmul.bf16.gmra.mxu0 %v1009
      %v1049 = vpop.f32.mrf.mxu0
      %v1050 = vadd.f32 %v981, %v1049
      %v1051 = vpop.f32.mrf.mxu0
      %v1052 = vadd.f32 %v981, %v1051
      %1053 = vmatmul.bf16.gmra.mxu0 %v1012
      %v1054 = vpop.f32.mrf.mxu0
      %v1055 = vadd.f32 %v981, %v1054
      %v1056 = vpop.f32.mrf.mxu0
      %v1057 = vadd.f32 %v981, %v1056
      %1058 = vmatmul.bf16.gmra.mxu0 %v1015
      %v1059 = vpop.f32.mrf.mxu0
      %v1060 = vadd.f32 %v981, %v1059
      %v1061 = vpop.f32.mrf.mxu0
      %v1062 = vadd.f32 %v981, %v1061
      %1063 = vmatmul.bf16.gmra.mxu0 %v1018
      %v1064 = vpop.f32.mrf.mxu0
      %v1065 = vadd.f32 %v981, %v1064
      %v1066 = vpop.f32.mrf.mxu0
      %v1067 = vadd.f32 %v981, %v1066
      %1068 = vdwg.mxu0
      %s1069 = scalar_lea.vmem %s383, %s634
      %v1070 = vld [vmem:[%s1069] sm:$0xff]
      %v1071 = vld [vmem:[%s1069 + $0x8] sm:$0xff]
      %v1072 = vld [vmem:[%s1069 + $0x10] sm:$0xff]
      %v1073 = vld [vmem:[%s1069 + $0x18] sm:$0xff]
      %v1074 = vld [vmem:[%s1069 + $0x20] sm:$0xff]
      %v1075 = vld [vmem:[%s1069 + $0x28] sm:$0xff]
      %v1076 = vld [vmem:[%s1069 + $0x30] sm:$0xff]
      %v1077 = vld [vmem:[%s1069 + $0x38] sm:$0xff]
      %v1078 = vld [vmem:[%s1069 + $0x40] sm:$0xff]
      %v1079 = vld [vmem:[%s1069 + $0x48] sm:$0xff]
      %v1080 = vld [vmem:[%s1069 + $0x50] sm:$0xff]
      %v1081 = vld [vmem:[%s1069 + $0x58] sm:$0xff]
      %v1082 = vld [vmem:[%s1069 + $0x60] sm:$0xff]
      %v1083 = vld [vmem:[%s1069 + $0x68] sm:$0xff]
      %v1084 = vld [vmem:[%s1069 + $0x70] sm:$0xff]
      %v1085 = vld [vmem:[%s1069 + $0x78] sm:$0xff]
      %v1086 = vadd.f32 %v1070, %v1030
      %v1087 = vadd.f32 %v1071, %v1032
      %v1088 = vadd.f32 %v1072, %v1035
      %v1089 = vadd.f32 %v1073, %v1037
      %v1090 = vadd.f32 %v1074, %v1040
      %v1091 = vadd.f32 %v1075, %v1042
      %v1092 = vadd.f32 %v1076, %v1045
      %v1093 = vadd.f32 %v1077, %v1047
      %v1094 = vadd.f32 %v1078, %v1050
      %v1095 = vadd.f32 %v1079, %v1052
      %v1096 = vadd.f32 %v1080, %v1055
      %v1097 = vadd.f32 %v1081, %v1057
      %v1098 = vadd.f32 %v1082, %v1060
      %v1099 = vadd.f32 %v1083, %v1062
      %v1100 = vadd.f32 %v1084, %v1065
      %v1101 = vadd.f32 %v1085, %v1067
      %v1102 = vpack.c.bf16 %v1087, %v1086
      %v1103 = vpack.c.bf16 %v1089, %v1088
      %v1104 = vpack.c.bf16 %v1091, %v1090
      %v1105 = vpack.c.bf16 %v1093, %v1092
      %v1106 = vpack.c.bf16 %v1095, %v1094
      %v1107 = vpack.c.bf16 %v1097, %v1096
      %v1108 = vpack.c.bf16 %v1099, %v1098
      %v1109 = vpack.c.bf16 %v1101, %v1100
      %v1110 = vld [vmem:[%s6] sm:$0xf]
      %v1111 = vld [vmem:[%s6 + $0x4] sm:$0xf]
      %v1112 = vld [vmem:[%s6 + $0x8] sm:$0xf]
      %v1113 = vld [vmem:[%s6 + $0xc] sm:$0xf]
      %v1114 = vld [vmem:[%s7] sm:$0x1]
      %v1116 = vperm.slane %v1114, 0
      %v1122 = vunpack.c.l.b16 %v1110
      %v1123 = vunpack.c.l.b16 %v1111
      %v1124 = vunpack.c.l.b16 %v1112
      %v1125 = vunpack.c.l.b16 %v1113
      %v1126 = vpack.c.b16 %v1123, %v1122
      %v1127 = vpack.c.b16 %v1125, %v1124
      %v1131 = vsel %vm995, %v1102, 0
      %v1134 = vsel %vm995, %v1103, 0
      %v1137 = vsel %vm995, %v1104, 0
      %v1140 = vsel %vm995, %v1105, 0
      %v1143 = vsel %vm995, %v1106, 0
      %v1146 = vsel %vm995, %v1107, 0
      %v1149 = vsel %vm995, %v1108, 0
      %v1152 = vsel %vm995, %v1109, 0
      %1154 = vmatpush.bf16.msra.mxu0 0
      %1155 = vmatpush.bf16.msra.mxu0 0
      %1156 = vmatpush.bf16.msra.mxu0 0
      %1157 = vmatpush.bf16.msra.mxu0 0
      %1158 = vmatpush.bf16.msra.mxu0 0
      %1159 = vmatpush.bf16.msra.mxu0 0
      %1160 = vmatpush.bf16.msra.mxu0 %v1127
      %1161 = vmatpush.bf16.msra.mxu0 %v1126
      %1162 = vmatmul.bf16.gmra.mxu0 %v1131
      %v1163 = vpop.f32.mrf.mxu0
      %v1164 = vadd.f32 %v1116, %v1163
      %v1165 = vpop.f32.mrf.mxu0
      %v1166 = vadd.f32 %v1116, %v1165
      %1167 = vmatmul.bf16.gmra.mxu0 %v1134
      %v1168 = vpop.f32.mrf.mxu0
      %v1169 = vadd.f32 %v1116, %v1168
      %v1170 = vpop.f32.mrf.mxu0
      %v1171 = vadd.f32 %v1116, %v1170
      %1172 = vmatmul.bf16.gmra.mxu0 %v1137
      %v1173 = vpop.f32.mrf.mxu0
      %v1174 = vadd.f32 %v1116, %v1173
      %v1175 = vpop.f32.mrf.mxu0
      %v1176 = vadd.f32 %v1116, %v1175
      %1177 = vmatmul.bf16.gmra.mxu0 %v1140
      %v1178 = vpop.f32.mrf.mxu0
      %v1179 = vadd.f32 %v1116, %v1178
      %v1180 = vpop.f32.mrf.mxu0
      %v1181 = vadd.f32 %v1116, %v1180
      %1182 = vmatmul.bf16.gmra.mxu0 %v1143
      %v1183 = vpop.f32.mrf.mxu0
      %v1184 = vadd.f32 %v1116, %v1183
      %v1185 = vpop.f32.mrf.mxu0
      %v1186 = vadd.f32 %v1116, %v1185
      %1187 = vmatmul.bf16.gmra.mxu0 %v1146
      %v1188 = vpop.f32.mrf.mxu0
      %v1189 = vadd.f32 %v1116, %v1188
      %v1190 = vpop.f32.mrf.mxu0
      %v1191 = vadd.f32 %v1116, %v1190
      %1192 = vmatmul.bf16.gmra.mxu0 %v1149
      %v1193 = vpop.f32.mrf.mxu0
      %v1194 = vadd.f32 %v1116, %v1193
      %v1195 = vpop.f32.mrf.mxu0
      %v1196 = vadd.f32 %v1116, %v1195
      %1197 = vmatmul.bf16.gmra.mxu0 %v1152
      %v1198 = vpop.f32.mrf.mxu0
      %v1199 = vadd.f32 %v1116, %v1198
      %v1200 = vpop.f32.mrf.mxu0
      %v1201 = vadd.f32 %v1116, %v1200
      %1202 = vdwg.mxu0
      %v1203 = vmul.f32 %v1164, 0.5
      %v1204 = vmul.f32 %v1166, 0.5
      %v1205 = vmul.f32 %v1169, 0.5
      %v1206 = vmul.f32 %v1171, 0.5
      %v1207 = vmul.f32 %v1174, 0.5
      %v1208 = vmul.f32 %v1176, 0.5
      %v1209 = vmul.f32 %v1179, 0.5
      %v1210 = vmul.f32 %v1181, 0.5
      %v1211 = vmul.f32 %v1184, 0.5
      %v1212 = vmul.f32 %v1186, 0.5
      %v1213 = vmul.f32 %v1189, 0.5
      %v1214 = vmul.f32 %v1191, 0.5
      %v1215 = vmul.f32 %v1194, 0.5
      %v1216 = vmul.f32 %v1196, 0.5
      %v1217 = vmul.f32 %v1199, 0.5
      %v1218 = vmul.f32 %v1201, 0.5
      %v1219 = vmul.f32 %v1164, 0.70710677
      %v1220 = vmul.f32 %v1166, 0.70710677
      %v1221 = vmul.f32 %v1169, 0.70710677
      %v1222 = vmul.f32 %v1171, 0.70710677
      %v1223 = vmul.f32 %v1174, 0.70710677
      %v1224 = vmul.f32 %v1176, 0.70710677
      %v1225 = vmul.f32 %v1179, 0.70710677
      %v1226 = vmul.f32 %v1181, 0.70710677
      %v1227 = vmul.f32 %v1184, 0.70710677
      %v1228 = vmul.f32 %v1186, 0.70710677
      %v1229 = vmul.f32 %v1189, 0.70710677
      %v1230 = vmul.f32 %v1191, 0.70710677
      %v1231 = vmul.f32 %v1194, 0.70710677
      %v1232 = vmul.f32 %v1196, 0.70710677
      %v1233 = vmul.f32 %v1199, 0.70710677
      %v1234 = vmul.f32 %v1201, 0.70710677
      %v1235 = vmul.f32 %v1219, %v1219
      %v1236 = vmin.f32 16.0, %v1235
      %v1237 = vmul.f32 %v1236, 2.1237322e-06
      %v1238 = vadd.f32 %v1237, 0.00028619796
      %v1239 = vmul.f32 %v1236, %v1238
      %v1240 = vadd.f32 %v1239, 0.0036580483
      %v1241 = vmul.f32 %v1236, %v1240
      %v1242 = vadd.f32 %v1241, 0.05243302
      %v1243 = vmul.f32 %v1236, %v1242
      %v1244 = vadd.f32 %v1243, 0.18741608
      %v1245 = vmul.f32 %v1236, %v1244
      %v1246 = vadd.f32 %v1245, 1.1283791
      %v1247 = vmul.f32 %v1219, %v1246
      %v1248 = vmul.f32 %v1236, 3.8918573e-05
      %v1249 = vadd.f32 %v1248, 0.001143296
      %v1250 = vmul.f32 %v1236, %v1249
      %v1251 = vadd.f32 %v1250, 0.014752088
      %v1252 = vmul.f32 %v1236, %v1251
      %v1253 = vadd.f32 %v1252, 0.112945676
      %v1254 = vmul.f32 %v1236, %v1253
      %v1255 = vadd.f32 %v1254, 0.4994258
      %v1256 = vmul.f32 %v1236, %v1255
      %v1257 = vadd.f32 %v1256, 1.0
      %v1258 = vrcp.pop %v1257
      %v1259 = vmul.f32 %v1257, %v1258
      %v1260 = vsub.f32 1.0, %v1259
      %v1261 = vmul.f32 %v1258, %v1260
      %v1262 = vadd.f32 %v1258, %v1261
      %vm1263 = vweird.f32 %v1257
      %vm1264 = vweird.f32 %v1258
      %vm1265 = vmor %vm1263, %vm1264
      %v1266 = vsel %vm1265, %v1258, %v1262
      %v1267 = vand.u32 2147483647, %v1257
      %vm1268 = vcmp.eq.f32.partialorder %v1267, 8.507059e+37
      %v1269 = vand.u32 %v1257, 2147483648
      %v1270 = vor.u32 1.1754944e-38, %v1269
      %v1271 = vsel %vm1268, %v1270, %v1266
      %v1272 = vmul.f32 %v1247, %v1271
      %v1273 = vmin.f32 %v1272, 1.0
      %v1274 = vmax.f32 %v1273, -1.0
      %v1275 = vmul.f32 %v1220, %v1220
      %v1276 = vmin.f32 16.0, %v1275
      %v1277 = vmul.f32 %v1276, 2.1237322e-06
      %v1278 = vadd.f32 %v1277, 0.00028619796
      %v1279 = vmul.f32 %v1276, %v1278
      %v1280 = vadd.f32 %v1279, 0.0036580483
      %v1281 = vmul.f32 %v1276, %v1280
      %v1282 = vadd.f32 %v1281, 0.05243302
      %v1283 = vmul.f32 %v1276, %v1282
      %v1284 = vadd.f32 %v1283, 0.18741608
      %v1285 = vmul.f32 %v1276, %v1284
      %v1286 = vadd.f32 %v1285, 1.1283791
      %v1287 = vmul.f32 %v1220, %v1286
      %v1288 = vmul.f32 %v1276, 3.8918573e-05
      %v1289 = vadd.f32 %v1288, 0.001143296
      %v1290 = vmul.f32 %v1276, %v1289
      %v1291 = vadd.f32 %v1290, 0.014752088
      %v1292 = vmul.f32 %v1276, %v1291
      %v1293 = vadd.f32 %v1292, 0.112945676
      %v1294 = vmul.f32 %v1276, %v1293
      %v1295 = vadd.f32 %v1294, 0.4994258
      %v1296 = vmul.f32 %v1276, %v1295
      %v1297 = vadd.f32 %v1296, 1.0
      %v1298 = vrcp.pop %v1297
      %v1299 = vmul.f32 %v1297, %v1298
      %v1300 = vsub.f32 1.0, %v1299
      %v1301 = vmul.f32 %v1298, %v1300
      %v1302 = vadd.f32 %v1298, %v1301
      %vm1303 = vweird.f32 %v1297
      %vm1304 = vweird.f32 %v1298
      %vm1305 = vmor %vm1303, %vm1304
      %v1306 = vsel %vm1305, %v1298, %v1302
      %v1307 = vand.u32 2147483647, %v1297
      %vm1308 = vcmp.eq.f32.partialorder %v1307, 8.507059e+37
      %v1309 = vand.u32 %v1297, 2147483648
      %v1310 = vor.u32 1.1754944e-38, %v1309
      %v1311 = vsel %vm1308, %v1310, %v1306
      %v1312 = vmul.f32 %v1287, %v1311
      %v1313 = vmin.f32 %v1312, 1.0
      %v1314 = vmax.f32 %v1313, -1.0
      %v1315 = vmul.f32 %v1221, %v1221
      %v1316 = vmin.f32 16.0, %v1315
      %v1317 = vmul.f32 %v1316, 2.1237322e-06
      %v1318 = vadd.f32 %v1317, 0.00028619796
      %v1319 = vmul.f32 %v1316, %v1318
      %v1320 = vadd.f32 %v1319, 0.0036580483
      %v1321 = vmul.f32 %v1316, %v1320
      %v1322 = vadd.f32 %v1321, 0.05243302
      %v1323 = vmul.f32 %v1316, %v1322
      %v1324 = vadd.f32 %v1323, 0.18741608
      %v1325 = vmul.f32 %v1316, %v1324
      %v1326 = vadd.f32 %v1325, 1.1283791
      %v1327 = vmul.f32 %v1221, %v1326
      %v1328 = vmul.f32 %v1316, 3.8918573e-05
      %v1329 = vadd.f32 %v1328, 0.001143296
      %v1330 = vmul.f32 %v1316, %v1329
      %v1331 = vadd.f32 %v1330, 0.014752088
      %v1332 = vmul.f32 %v1316, %v1331
      %v1333 = vadd.f32 %v1332, 0.112945676
      %v1334 = vmul.f32 %v1316, %v1333
      %v1335 = vadd.f32 %v1334, 0.4994258
      %v1336 = vmul.f32 %v1316, %v1335
      %v1337 = vadd.f32 %v1336, 1.0
      %v1338 = vrcp.pop %v1337
      %v1339 = vmul.f32 %v1337, %v1338
      %v1340 = vsub.f32 1.0, %v1339
      %v1341 = vmul.f32 %v1338, %v1340
      %v1342 = vadd.f32 %v1338, %v1341
      %vm1343 = vweird.f32 %v1337
      %vm1344 = vweird.f32 %v1338
      %vm1345 = vmor %vm1343, %vm1344
      %v1346 = vsel %vm1345, %v1338, %v1342
      %v1347 = vand.u32 2147483647, %v1337
      %vm1348 = vcmp.eq.f32.partialorder %v1347, 8.507059e+37
      %v1349 = vand.u32 %v1337, 2147483648
      %v1350 = vor.u32 1.1754944e-38, %v1349
      %v1351 = vsel %vm1348, %v1350, %v1346
      %v1352 = vmul.f32 %v1327, %v1351
      %v1353 = vmin.f32 %v1352, 1.0
      %v1354 = vmax.f32 %v1353, -1.0
      %v1355 = vmul.f32 %v1222, %v1222
      %v1356 = vmin.f32 16.0, %v1355
      %v1357 = vmul.f32 %v1356, 2.1237322e-06
      %v1358 = vadd.f32 %v1357, 0.00028619796
      %v1359 = vmul.f32 %v1356, %v1358
      %v1360 = vadd.f32 %v1359, 0.0036580483
      %v1361 = vmul.f32 %v1356, %v1360
      %v1362 = vadd.f32 %v1361, 0.05243302
      %v1363 = vmul.f32 %v1356, %v1362
      %v1364 = vadd.f32 %v1363, 0.18741608
      %v1365 = vmul.f32 %v1356, %v1364
      %v1366 = vadd.f32 %v1365, 1.1283791
      %v1367 = vmul.f32 %v1222, %v1366
      %v1368 = vmul.f32 %v1356, 3.8918573e-05
      %v1369 = vadd.f32 %v1368, 0.001143296
      %v1370 = vmul.f32 %v1356, %v1369
      %v1371 = vadd.f32 %v1370, 0.014752088
      %v1372 = vmul.f32 %v1356, %v1371
      %v1373 = vadd.f32 %v1372, 0.112945676
      %v1374 = vmul.f32 %v1356, %v1373
      %v1375 = vadd.f32 %v1374, 0.4994258
      %v1376 = vmul.f32 %v1356, %v1375
      %v1377 = vadd.f32 %v1376, 1.0
      %v1378 = vrcp.pop %v1377
      %v1379 = vmul.f32 %v1377, %v1378
      %v1380 = vsub.f32 1.0, %v1379
      %v1381 = vmul.f32 %v1378, %v1380
      %v1382 = vadd.f32 %v1378, %v1381
      %vm1383 = vweird.f32 %v1377
      %vm1384 = vweird.f32 %v1378
      %vm1385 = vmor %vm1383, %vm1384
      %v1386 = vsel %vm1385, %v1378, %v1382
      %v1387 = vand.u32 2147483647, %v1377
      %vm1388 = vcmp.eq.f32.partialorder %v1387, 8.507059e+37
      %v1389 = vand.u32 %v1377, 2147483648
      %v1390 = vor.u32 1.1754944e-38, %v1389
      %v1391 = vsel %vm1388, %v1390, %v1386
      %v1392 = vmul.f32 %v1367, %v1391
      %v1393 = vmin.f32 %v1392, 1.0
      %v1394 = vmax.f32 %v1393, -1.0
      %v1395 = vmul.f32 %v1223, %v1223
      %v1396 = vmin.f32 16.0, %v1395
      %v1397 = vmul.f32 %v1396, 2.1237322e-06
      %v1398 = vadd.f32 %v1397, 0.00028619796
      %v1399 = vmul.f32 %v1396, %v1398
      %v1400 = vadd.f32 %v1399, 0.0036580483
      %v1401 = vmul.f32 %v1396, %v1400
      %v1402 = vadd.f32 %v1401, 0.05243302
      %v1403 = vmul.f32 %v1396, %v1402
      %v1404 = vadd.f32 %v1403, 0.18741608
      %v1405 = vmul.f32 %v1396, %v1404
      %v1406 = vadd.f32 %v1405, 1.1283791
      %v1407 = vmul.f32 %v1223, %v1406
      %v1408 = vmul.f32 %v1396, 3.8918573e-05
      %v1409 = vadd.f32 %v1408, 0.001143296
      %v1410 = vmul.f32 %v1396, %v1409
      %v1411 = vadd.f32 %v1410, 0.014752088
      %v1412 = vmul.f32 %v1396, %v1411
      %v1413 = vadd.f32 %v1412, 0.112945676
      %v1414 = vmul.f32 %v1396, %v1413
      %v1415 = vadd.f32 %v1414, 0.4994258
      %v1416 = vmul.f32 %v1396, %v1415
      %v1417 = vadd.f32 %v1416, 1.0
      %v1418 = vrcp.pop %v1417
      %v1419 = vmul.f32 %v1417, %v1418
      %v1420 = vsub.f32 1.0, %v1419
      %v1421 = vmul.f32 %v1418, %v1420
      %v1422 = vadd.f32 %v1418, %v1421
      %vm1423 = vweird.f32 %v1417
      %vm1424 = vweird.f32 %v1418
      %vm1425 = vmor %vm1423, %vm1424
      %v1426 = vsel %vm1425, %v1418, %v1422
      %v1427 = vand.u32 2147483647, %v1417
      %vm1428 = vcmp.eq.f32.partialorder %v1427, 8.507059e+37
      %v1429 = vand.u32 %v1417, 2147483648
      %v1430 = vor.u32 1.1754944e-38, %v1429
      %v1431 = vsel %vm1428, %v1430, %v1426
      %v1432 = vmul.f32 %v1407, %v1431
      %v1433 = vmin.f32 %v1432, 1.0
      %v1434 = vmax.f32 %v1433, -1.0
      %v1435 = vmul.f32 %v1224, %v1224
      %v1436 = vmin.f32 16.0, %v1435
      %v1437 = vmul.f32 %v1436, 2.1237322e-06
      %v1438 = vadd.f32 %v1437, 0.00028619796
      %v1439 = vmul.f32 %v1436, %v1438
      %v1440 = vadd.f32 %v1439, 0.0036580483
      %v1441 = vmul.f32 %v1436, %v1440
      %v1442 = vadd.f32 %v1441, 0.05243302
      %v1443 = vmul.f32 %v1436, %v1442
      %v1444 = vadd.f32 %v1443, 0.18741608
      %v1445 = vmul.f32 %v1436, %v1444
      %v1446 = vadd.f32 %v1445, 1.1283791
      %v1447 = vmul.f32 %v1224, %v1446
      %v1448 = vmul.f32 %v1436, 3.8918573e-05
      %v1449 = vadd.f32 %v1448, 0.001143296
      %v1450 = vmul.f32 %v1436, %v1449
      %v1451 = vadd.f32 %v1450, 0.014752088
      %v1452 = vmul.f32 %v1436, %v1451
      %v1453 = vadd.f32 %v1452, 0.112945676
      %v1454 = vmul.f32 %v1436, %v1453
      %v1455 = vadd.f32 %v1454, 0.4994258
      %v1456 = vmul.f32 %v1436, %v1455
      %v1457 = vadd.f32 %v1456, 1.0
      %v1458 = vrcp.pop %v1457
      %v1459 = vmul.f32 %v1457, %v1458
      %v1460 = vsub.f32 1.0, %v1459
      %v1461 = vmul.f32 %v1458, %v1460
      %v1462 = vadd.f32 %v1458, %v1461
      %vm1463 = vweird.f32 %v1457
      %vm1464 = vweird.f32 %v1458
      %vm1465 = vmor %vm1463, %vm1464
      %v1466 = vsel %vm1465, %v1458, %v1462
      %v1467 = vand.u32 2147483647, %v1457
      %vm1468 = vcmp.eq.f32.partialorder %v1467, 8.507059e+37
      %v1469 = vand.u32 %v1457, 2147483648
      %v1470 = vor.u32 1.1754944e-38, %v1469
      %v1471 = vsel %vm1468, %v1470, %v1466
      %v1472 = vmul.f32 %v1447, %v1471
      %v1473 = vmin.f32 %v1472, 1.0
      %v1474 = vmax.f32 %v1473, -1.0
      %v1475 = vmul.f32 %v1225, %v1225
      %v1476 = vmin.f32 16.0, %v1475
      %v1477 = vmul.f32 %v1476, 2.1237322e-06
      %v1478 = vadd.f32 %v1477, 0.00028619796
      %v1479 = vmul.f32 %v1476, %v1478
      %v1480 = vadd.f32 %v1479, 0.0036580483
      %v1481 = vmul.f32 %v1476, %v1480
      %v1482 = vadd.f32 %v1481, 0.05243302
      %v1483 = vmul.f32 %v1476, %v1482
      %v1484 = vadd.f32 %v1483, 0.18741608
      %v1485 = vmul.f32 %v1476, %v1484
      %v1486 = vadd.f32 %v1485, 1.1283791
      %v1487 = vmul.f32 %v1225, %v1486
      %v1488 = vmul.f32 %v1476, 3.8918573e-05
      %v1489 = vadd.f32 %v1488, 0.001143296
      %v1490 = vmul.f32 %v1476, %v1489
      %v1491 = vadd.f32 %v1490, 0.014752088
      %v1492 = vmul.f32 %v1476, %v1491
      %v1493 = vadd.f32 %v1492, 0.112945676
      %v1494 = vmul.f32 %v1476, %v1493
      %v1495 = vadd.f32 %v1494, 0.4994258
      %v1496 = vmul.f32 %v1476, %v1495
      %v1497 = vadd.f32 %v1496, 1.0
      %v1498 = vrcp.pop %v1497
      %v1499 = vmul.f32 %v1497, %v1498
      %v1500 = vsub.f32 1.0, %v1499
      %v1501 = vmul.f32 %v1498, %v1500
      %v1502 = vadd.f32 %v1498, %v1501
      %vm1503 = vweird.f32 %v1497
      %vm1504 = vweird.f32 %v1498
      %vm1505 = vmor %vm1503, %vm1504
      %v1506 = vsel %vm1505, %v1498, %v1502
      %v1507 = vand.u32 2147483647, %v1497
      %vm1508 = vcmp.eq.f32.partialorder %v1507, 8.507059e+37
      %v1509 = vand.u32 %v1497, 2147483648
      %v1510 = vor.u32 1.1754944e-38, %v1509
      %v1511 = vsel %vm1508, %v1510, %v1506
      %v1512 = vmul.f32 %v1487, %v1511
      %v1513 = vmin.f32 %v1512, 1.0
      %v1514 = vmax.f32 %v1513, -1.0
      %v1515 = vmul.f32 %v1226, %v1226
      %v1516 = vmin.f32 16.0, %v1515
      %v1517 = vmul.f32 %v1516, 2.1237322e-06
      %v1518 = vadd.f32 %v1517, 0.00028619796
      %v1519 = vmul.f32 %v1516, %v1518
      %v1520 = vadd.f32 %v1519, 0.0036580483
      %v1521 = vmul.f32 %v1516, %v1520
      %v1522 = vadd.f32 %v1521, 0.05243302
      %v1523 = vmul.f32 %v1516, %v1522
      %v1524 = vadd.f32 %v1523, 0.18741608
      %v1525 = vmul.f32 %v1516, %v1524
      %v1526 = vadd.f32 %v1525, 1.1283791
      %v1527 = vmul.f32 %v1226, %v1526
      %v1528 = vmul.f32 %v1516, 3.8918573e-05
      %v1529 = vadd.f32 %v1528, 0.001143296
      %v1530 = vmul.f32 %v1516, %v1529
      %v1531 = vadd.f32 %v1530, 0.014752088
      %v1532 = vmul.f32 %v1516, %v1531
      %v1533 = vadd.f32 %v1532, 0.112945676
      %v1534 = vmul.f32 %v1516, %v1533
      %v1535 = vadd.f32 %v1534, 0.4994258
      %v1536 = vmul.f32 %v1516, %v1535
      %v1537 = vadd.f32 %v1536, 1.0
      %v1538 = vrcp.pop %v1537
      %v1539 = vmul.f32 %v1537, %v1538
      %v1540 = vsub.f32 1.0, %v1539
      %v1541 = vmul.f32 %v1538, %v1540
      %v1542 = vadd.f32 %v1538, %v1541
      %vm1543 = vweird.f32 %v1537
      %vm1544 = vweird.f32 %v1538
      %vm1545 = vmor %vm1543, %vm1544
      %v1546 = vsel %vm1545, %v1538, %v1542
      %v1547 = vand.u32 2147483647, %v1537
      %vm1548 = vcmp.eq.f32.partialorder %v1547, 8.507059e+37
      %v1549 = vand.u32 %v1537, 2147483648
      %v1550 = vor.u32 1.1754944e-38, %v1549
      %v1551 = vsel %vm1548, %v1550, %v1546
      %v1552 = vmul.f32 %v1527, %v1551
      %v1553 = vmin.f32 %v1552, 1.0
      %v1554 = vmax.f32 %v1553, -1.0
      %v1555 = vmul.f32 %v1227, %v1227
      %v1556 = vmin.f32 16.0, %v1555
      %v1557 = vmul.f32 %v1556, 2.1237322e-06
      %v1558 = vadd.f32 %v1557, 0.00028619796
      %v1559 = vmul.f32 %v1556, %v1558
      %v1560 = vadd.f32 %v1559, 0.0036580483
      %v1561 = vmul.f32 %v1556, %v1560
      %v1562 = vadd.f32 %v1561, 0.05243302
      %v1563 = vmul.f32 %v1556, %v1562
      %v1564 = vadd.f32 %v1563, 0.18741608
      %v1565 = vmul.f32 %v1556, %v1564
      %v1566 = vadd.f32 %v1565, 1.1283791
      %v1567 = vmul.f32 %v1227, %v1566
      %v1568 = vmul.f32 %v1556, 3.8918573e-05
      %v1569 = vadd.f32 %v1568, 0.001143296
      %v1570 = vmul.f32 %v1556, %v1569
      %v1571 = vadd.f32 %v1570, 0.014752088
      %v1572 = vmul.f32 %v1556, %v1571
      %v1573 = vadd.f32 %v1572, 0.112945676
      %v1574 = vmul.f32 %v1556, %v1573
      %v1575 = vadd.f32 %v1574, 0.4994258
      %v1576 = vmul.f32 %v1556, %v1575
      %v1577 = vadd.f32 %v1576, 1.0
      %v1578 = vrcp.pop %v1577
      %v1579 = vmul.f32 %v1577, %v1578
      %v1580 = vsub.f32 1.0, %v1579
      %v1581 = vmul.f32 %v1578, %v1580
      %v1582 = vadd.f32 %v1578, %v1581
      %vm1583 = vweird.f32 %v1577
      %vm1584 = vweird.f32 %v1578
      %vm1585 = vmor %vm1583, %vm1584
      %v1586 = vsel %vm1585, %v1578, %v1582
      %v1587 = vand.u32 2147483647, %v1577
      %vm1588 = vcmp.eq.f32.partialorder %v1587, 8.507059e+37
      %v1589 = vand.u32 %v1577, 2147483648
      %v1590 = vor.u32 1.1754944e-38, %v1589
      %v1591 = vsel %vm1588, %v1590, %v1586
      %v1592 = vmul.f32 %v1567, %v1591
      %v1593 = vmin.f32 %v1592, 1.0
      %v1594 = vmax.f32 %v1593, -1.0
      %v1595 = vmul.f32 %v1228, %v1228
      %v1596 = vmin.f32 16.0, %v1595
      %v1597 = vmul.f32 %v1596, 2.1237322e-06
      %v1598 = vadd.f32 %v1597, 0.00028619796
      %v1599 = vmul.f32 %v1596, %v1598
      %v1600 = vadd.f32 %v1599, 0.0036580483
      %v1601 = vmul.f32 %v1596, %v1600
      %v1602 = vadd.f32 %v1601, 0.05243302
      %v1603 = vmul.f32 %v1596, %v1602
      %v1604 = vadd.f32 %v1603, 0.18741608
      %v1605 = vmul.f32 %v1596, %v1604
      %v1606 = vadd.f32 %v1605, 1.1283791
      %v1607 = vmul.f32 %v1228, %v1606
      %v1608 = vmul.f32 %v1596, 3.8918573e-05
      %v1609 = vadd.f32 %v1608, 0.001143296
      %v1610 = vmul.f32 %v1596, %v1609
      %v1611 = vadd.f32 %v1610, 0.014752088
      %v1612 = vmul.f32 %v1596, %v1611
      %v1613 = vadd.f32 %v1612, 0.112945676
      %v1614 = vmul.f32 %v1596, %v1613
      %v1615 = vadd.f32 %v1614, 0.4994258
      %v1616 = vmul.f32 %v1596, %v1615
      %v1617 = vadd.f32 %v1616, 1.0
      %v1618 = vrcp.pop %v1617
      %v1619 = vmul.f32 %v1617, %v1618
      %v1620 = vsub.f32 1.0, %v1619
      %v1621 = vmul.f32 %v1618, %v1620
      %v1622 = vadd.f32 %v1618, %v1621
      %vm1623 = vweird.f32 %v1617
      %vm1624 = vweird.f32 %v1618
      %vm1625 = vmor %vm1623, %vm1624
      %v1626 = vsel %vm1625, %v1618, %v1622
      %v1627 = vand.u32 2147483647, %v1617
      %vm1628 = vcmp.eq.f32.partialorder %v1627, 8.507059e+37
      %v1629 = vand.u32 %v1617, 2147483648
      %v1630 = vor.u32 1.1754944e-38, %v1629
      %v1631 = vsel %vm1628, %v1630, %v1626
      %v1632 = vmul.f32 %v1607, %v1631
      %v1633 = vmin.f32 %v1632, 1.0
      %v1634 = vmax.f32 %v1633, -1.0
      %v1635 = vmul.f32 %v1229, %v1229
      %v1636 = vmin.f32 16.0, %v1635
      %v1637 = vmul.f32 %v1636, 2.1237322e-06
      %v1638 = vadd.f32 %v1637, 0.00028619796
      %v1639 = vmul.f32 %v1636, %v1638
      %v1640 = vadd.f32 %v1639, 0.0036580483
      %v1641 = vmul.f32 %v1636, %v1640
      %v1642 = vadd.f32 %v1641, 0.05243302
      %v1643 = vmul.f32 %v1636, %v1642
      %v1644 = vadd.f32 %v1643, 0.18741608
      %v1645 = vmul.f32 %v1636, %v1644
      %v1646 = vadd.f32 %v1645, 1.1283791
      %v1647 = vmul.f32 %v1229, %v1646
      %v1648 = vmul.f32 %v1636, 3.8918573e-05
      %v1649 = vadd.f32 %v1648, 0.001143296
      %v1650 = vmul.f32 %v1636, %v1649
      %v1651 = vadd.f32 %v1650, 0.014752088
      %v1652 = vmul.f32 %v1636, %v1651
      %v1653 = vadd.f32 %v1652, 0.112945676
      %v1654 = vmul.f32 %v1636, %v1653
      %v1655 = vadd.f32 %v1654, 0.4994258
      %v1656 = vmul.f32 %v1636, %v1655
      %v1657 = vadd.f32 %v1656, 1.0
      %v1658 = vrcp.pop %v1657
      %v1659 = vmul.f32 %v1657, %v1658
      %v1660 = vsub.f32 1.0, %v1659
      %v1661 = vmul.f32 %v1658, %v1660
      %v1662 = vadd.f32 %v1658, %v1661
      %vm1663 = vweird.f32 %v1657
      %vm1664 = vweird.f32 %v1658
      %vm1665 = vmor %vm1663, %vm1664
      %v1666 = vsel %vm1665, %v1658, %v1662
      %v1667 = vand.u32 2147483647, %v1657
      %vm1668 = vcmp.eq.f32.partialorder %v1667, 8.507059e+37
      %v1669 = vand.u32 %v1657, 2147483648
      %v1670 = vor.u32 1.1754944e-38, %v1669
      %v1671 = vsel %vm1668, %v1670, %v1666
      %v1672 = vmul.f32 %v1647, %v1671
      %v1673 = vmin.f32 %v1672, 1.0
      %v1674 = vmax.f32 %v1673, -1.0
      %v1675 = vmul.f32 %v1230, %v1230
      %v1676 = vmin.f32 16.0, %v1675
      %v1677 = vmul.f32 %v1676, 2.1237322e-06
      %v1678 = vadd.f32 %v1677, 0.00028619796
      %v1679 = vmul.f32 %v1676, %v1678
      %v1680 = vadd.f32 %v1679, 0.0036580483
      %v1681 = vmul.f32 %v1676, %v1680
      %v1682 = vadd.f32 %v1681, 0.05243302
      %v1683 = vmul.f32 %v1676, %v1682
      %v1684 = vadd.f32 %v1683, 0.18741608
      %v1685 = vmul.f32 %v1676, %v1684
      %v1686 = vadd.f32 %v1685, 1.1283791
      %v1687 = vmul.f32 %v1230, %v1686
      %v1688 = vmul.f32 %v1676, 3.8918573e-05
      %v1689 = vadd.f32 %v1688, 0.001143296
      %v1690 = vmul.f32 %v1676, %v1689
      %v1691 = vadd.f32 %v1690, 0.014752088
      %v1692 = vmul.f32 %v1676, %v1691
      %v1693 = vadd.f32 %v1692, 0.112945676
      %v1694 = vmul.f32 %v1676, %v1693
      %v1695 = vadd.f32 %v1694, 0.4994258
      %v1696 = vmul.f32 %v1676, %v1695
      %v1697 = vadd.f32 %v1696, 1.0
      %v1698 = vrcp.pop %v1697
      %v1699 = vmul.f32 %v1697, %v1698
      %v1700 = vsub.f32 1.0, %v1699
      %v1701 = vmul.f32 %v1698, %v1700
      %v1702 = vadd.f32 %v1698, %v1701
      %vm1703 = vweird.f32 %v1697
      %vm1704 = vweird.f32 %v1698
      %vm1705 = vmor %vm1703, %vm1704
      %v1706 = vsel %vm1705, %v1698, %v1702
      %v1707 = vand.u32 2147483647, %v1697
      %vm1708 = vcmp.eq.f32.partialorder %v1707, 8.507059e+37
      %v1709 = vand.u32 %v1697, 2147483648
      %v1710 = vor.u32 1.1754944e-38, %v1709
      %v1711 = vsel %vm1708, %v1710, %v1706
      %v1712 = vmul.f32 %v1687, %v1711
      %v1713 = vmin.f32 %v1712, 1.0
      %v1714 = vmax.f32 %v1713, -1.0
      %v1715 = vmul.f32 %v1231, %v1231
      %v1716 = vmin.f32 16.0, %v1715
      %v1717 = vmul.f32 %v1716, 2.1237322e-06
      %v1718 = vadd.f32 %v1717, 0.00028619796
      %v1719 = vmul.f32 %v1716, %v1718
      %v1720 = vadd.f32 %v1719, 0.0036580483
      %v1721 = vmul.f32 %v1716, %v1720
      %v1722 = vadd.f32 %v1721, 0.05243302
      %v1723 = vmul.f32 %v1716, %v1722
      %v1724 = vadd.f32 %v1723, 0.18741608
      %v1725 = vmul.f32 %v1716, %v1724
      %v1726 = vadd.f32 %v1725, 1.1283791
      %v1727 = vmul.f32 %v1231, %v1726
      %v1728 = vmul.f32 %v1716, 3.8918573e-05
      %v1729 = vadd.f32 %v1728, 0.001143296
      %v1730 = vmul.f32 %v1716, %v1729
      %v1731 = vadd.f32 %v1730, 0.014752088
      %v1732 = vmul.f32 %v1716, %v1731
      %v1733 = vadd.f32 %v1732, 0.112945676
      %v1734 = vmul.f32 %v1716, %v1733
      %v1735 = vadd.f32 %v1734, 0.4994258
      %v1736 = vmul.f32 %v1716, %v1735
      %v1737 = vadd.f32 %v1736, 1.0
      %v1738 = vrcp.pop %v1737
      %v1739 = vmul.f32 %v1737, %v1738
      %v1740 = vsub.f32 1.0, %v1739
      %v1741 = vmul.f32 %v1738, %v1740
      %v1742 = vadd.f32 %v1738, %v1741
      %vm1743 = vweird.f32 %v1737
      %vm1744 = vweird.f32 %v1738
      %vm1745 = vmor %vm1743, %vm1744
      %v1746 = vsel %vm1745, %v1738, %v1742
      %v1747 = vand.u32 2147483647, %v1737
      %vm1748 = vcmp.eq.f32.partialorder %v1747, 8.507059e+37
      %v1749 = vand.u32 %v1737, 2147483648
      %v1750 = vor.u32 1.1754944e-38, %v1749
      %v1751 = vsel %vm1748, %v1750, %v1746
      %v1752 = vmul.f32 %v1727, %v1751
      %v1753 = vmin.f32 %v1752, 1.0
      %v1754 = vmax.f32 %v1753, -1.0
      %v1755 = vmul.f32 %v1232, %v1232
      %v1756 = vmin.f32 16.0, %v1755
      %v1757 = vmul.f32 %v1756, 2.1237322e-06
      %v1758 = vadd.f32 %v1757, 0.00028619796
      %v1759 = vmul.f32 %v1756, %v1758
      %v1760 = vadd.f32 %v1759, 0.0036580483
      %v1761 = vmul.f32 %v1756, %v1760
      %v1762 = vadd.f32 %v1761, 0.05243302
      %v1763 = vmul.f32 %v1756, %v1762
      %v1764 = vadd.f32 %v1763, 0.18741608
      %v1765 = vmul.f32 %v1756, %v1764
      %v1766 = vadd.f32 %v1765, 1.1283791
      %v1767 = vmul.f32 %v1232, %v1766
      %v1768 = vmul.f32 %v1756, 3.8918573e-05
      %v1769 = vadd.f32 %v1768, 0.001143296
      %v1770 = vmul.f32 %v1756, %v1769
      %v1771 = vadd.f32 %v1770, 0.014752088
      %v1772 = vmul.f32 %v1756, %v1771
      %v1773 = vadd.f32 %v1772, 0.112945676
      %v1774 = vmul.f32 %v1756, %v1773
      %v1775 = vadd.f32 %v1774, 0.4994258
      %v1776 = vmul.f32 %v1756, %v1775
      %v1777 = vadd.f32 %v1776, 1.0
      %v1778 = vrcp.pop %v1777
      %v1779 = vmul.f32 %v1777, %v1778
      %v1780 = vsub.f32 1.0, %v1779
      %v1781 = vmul.f32 %v1778, %v1780
      %v1782 = vadd.f32 %v1778, %v1781
      %vm1783 = vweird.f32 %v1777
      %vm1784 = vweird.f32 %v1778
      %vm1785 = vmor %vm1783, %vm1784
      %v1786 = vsel %vm1785, %v1778, %v1782
      %v1787 = vand.u32 2147483647, %v1777
      %vm1788 = vcmp.eq.f32.partialorder %v1787, 8.507059e+37
      %v1789 = vand.u32 %v1777, 2147483648
      %v1790 = vor.u32 1.1754944e-38, %v1789
      %v1791 = vsel %vm1788, %v1790, %v1786
      %v1792 = vmul.f32 %v1767, %v1791
      %v1793 = vmin.f32 %v1792, 1.0
      %v1794 = vmax.f32 %v1793, -1.0
      %v1795 = vmul.f32 %v1233, %v1233
      %v1796 = vmin.f32 16.0, %v1795
      %v1797 = vmul.f32 %v1796, 2.1237322e-06
      %v1798 = vadd.f32 %v1797, 0.00028619796
      %v1799 = vmul.f32 %v1796, %v1798
      %v1800 = vadd.f32 %v1799, 0.0036580483
      %v1801 = vmul.f32 %v1796, %v1800
      %v1802 = vadd.f32 %v1801, 0.05243302
      %v1803 = vmul.f32 %v1796, %v1802
      %v1804 = vadd.f32 %v1803, 0.18741608
      %v1805 = vmul.f32 %v1796, %v1804
      %v1806 = vadd.f32 %v1805, 1.1283791
      %v1807 = vmul.f32 %v1233, %v1806
      %v1808 = vmul.f32 %v1796, 3.8918573e-05
      %v1809 = vadd.f32 %v1808, 0.001143296
      %v1810 = vmul.f32 %v1796, %v1809
      %v1811 = vadd.f32 %v1810, 0.014752088
      %v1812 = vmul.f32 %v1796, %v1811
      %v1813 = vadd.f32 %v1812, 0.112945676
      %v1814 = vmul.f32 %v1796, %v1813
      %v1815 = vadd.f32 %v1814, 0.4994258
      %v1816 = vmul.f32 %v1796, %v1815
      %v1817 = vadd.f32 %v1816, 1.0
      %v1818 = vrcp.pop %v1817
      %v1819 = vmul.f32 %v1817, %v1818
      %v1820 = vsub.f32 1.0, %v1819
      %v1821 = vmul.f32 %v1818, %v1820
      %v1822 = vadd.f32 %v1818, %v1821
      %vm1823 = vweird.f32 %v1817
      %vm1824 = vweird.f32 %v1818
      %vm1825 = vmor %vm1823, %vm1824
      %v1826 = vsel %vm1825, %v1818, %v1822
      %v1827 = vand.u32 2147483647, %v1817
      %vm1828 = vcmp.eq.f32.partialorder %v1827, 8.507059e+37
      %v1829 = vand.u32 %v1817, 2147483648
      %v1830 = vor.u32 1.1754944e-38, %v1829
      %v1831 = vsel %vm1828, %v1830, %v1826
      %v1832 = vmul.f32 %v1807, %v1831
      %v1833 = vmin.f32 %v1832, 1.0
      %v1834 = vmax.f32 %v1833, -1.0
      %v1835 = vmul.f32 %v1234, %v1234
      %v1836 = vmin.f32 16.0, %v1835
      %v1837 = vmul.f32 %v1836, 2.1237322e-06
      %v1838 = vadd.f32 %v1837, 0.00028619796
      %v1839 = vmul.f32 %v1836, %v1838
      %v1840 = vadd.f32 %v1839, 0.0036580483
      %v1841 = vmul.f32 %v1836, %v1840
      %v1842 = vadd.f32 %v1841, 0.05243302
      %v1843 = vmul.f32 %v1836, %v1842
      %v1844 = vadd.f32 %v1843, 0.18741608
      %v1845 = vmul.f32 %v1836, %v1844
      %v1846 = vadd.f32 %v1845, 1.1283791
      %v1847 = vmul.f32 %v1234, %v1846
      %v1848 = vmul.f32 %v1836, 3.8918573e-05
      %v1849 = vadd.f32 %v1848, 0.001143296
      %v1850 = vmul.f32 %v1836, %v1849
      %v1851 = vadd.f32 %v1850, 0.014752088
      %v1852 = vmul.f32 %v1836, %v1851
      %v1853 = vadd.f32 %v1852, 0.112945676
      %v1854 = vmul.f32 %v1836, %v1853
      %v1855 = vadd.f32 %v1854, 0.4994258
      %v1856 = vmul.f32 %v1836, %v1855
      %v1857 = vadd.f32 %v1856, 1.0
      %v1858 = vrcp.pop %v1857
      %v1859 = vmul.f32 %v1857, %v1858
      %v1860 = vsub.f32 1.0, %v1859
      %v1861 = vmul.f32 %v1858, %v1860
      %v1862 = vadd.f32 %v1858, %v1861
      %vm1863 = vweird.f32 %v1857
      %vm1864 = vweird.f32 %v1858
      %vm1865 = vmor %vm1863, %vm1864
      %v1866 = vsel %vm1865, %v1858, %v1862
      %v1867 = vand.u32 2147483647, %v1857
      %vm1868 = vcmp.eq.f32.partialorder %v1867, 8.507059e+37
      %v1869 = vand.u32 %v1857, 2147483648
      %v1870 = vor.u32 1.1754944e-38, %v1869
      %v1871 = vsel %vm1868, %v1870, %v1866
      %v1872 = vmul.f32 %v1847, %v1871
      %v1873 = vmin.f32 %v1872, 1.0
      %v1874 = vmax.f32 %v1873, -1.0
      %v1875 = vadd.f32 %v1274, 1.0
      %v1876 = vadd.f32 %v1314, 1.0
      %v1877 = vadd.f32 %v1354, 1.0
      %v1878 = vadd.f32 %v1394, 1.0
      %v1879 = vadd.f32 %v1434, 1.0
      %v1880 = vadd.f32 %v1474, 1.0
      %v1881 = vadd.f32 %v1514, 1.0
      %v1882 = vadd.f32 %v1554, 1.0
      %v1883 = vadd.f32 %v1594, 1.0
      %v1884 = vadd.f32 %v1634, 1.0
      %v1885 = vadd.f32 %v1674, 1.0
      %v1886 = vadd.f32 %v1714, 1.0
      %v1887 = vadd.f32 %v1754, 1.0
      %v1888 = vadd.f32 %v1794, 1.0
      %v1889 = vadd.f32 %v1834, 1.0
      %v1890 = vadd.f32 %v1874, 1.0
      %v1891 = vmul.f32 %v1203, %v1875
      %v1892 = vmul.f32 %v1204, %v1876
      %v1893 = vmul.f32 %v1205, %v1877
      %v1894 = vmul.f32 %v1206, %v1878
      %v1895 = vmul.f32 %v1207, %v1879
      %v1896 = vmul.f32 %v1208, %v1880
      %v1897 = vmul.f32 %v1209, %v1881
      %v1898 = vmul.f32 %v1210, %v1882
      %v1899 = vmul.f32 %v1211, %v1883
      %v1900 = vmul.f32 %v1212, %v1884
      %v1901 = vmul.f32 %v1213, %v1885
      %v1902 = vmul.f32 %v1214, %v1886
      %v1903 = vmul.f32 %v1215, %v1887
      %v1904 = vmul.f32 %v1216, %v1888
      %v1905 = vmul.f32 %v1217, %v1889
      %v1906 = vmul.f32 %v1218, %v1890
      %v1907 = vpack.c.bf16 %v1892, %v1891
      %v1908 = vpack.c.bf16 %v1894, %v1893
      %v1909 = vpack.c.bf16 %v1896, %v1895
      %v1910 = vpack.c.bf16 %v1898, %v1897
      %v1911 = vpack.c.bf16 %v1900, %v1899
      %v1912 = vpack.c.bf16 %v1902, %v1901
      %v1913 = vpack.c.bf16 %v1904, %v1903
      %v1914 = vpack.c.bf16 %v1906, %v1905
      %v1915 = vld [vmem:[%s8] sm:$0xf]
      %v1916 = vld [vmem:[%s8 + $0x4] sm:$0xf]
      %v1917 = vld [vmem:[%s8 + $0x8] sm:$0xf]
      %v1918 = vld [vmem:[%s8 + $0xc] sm:$0xf]
      %v1919 = vld [vmem:[%s8 + $0x10] sm:$0xf]
      %v1920 = vld [vmem:[%s8 + $0x14] sm:$0xf]
      %v1921 = vld [vmem:[%s8 + $0x18] sm:$0xf]
      %v1922 = vld [vmem:[%s8 + $0x1c] sm:$0xf]
      %v1923 = vld [vmem:[%s9] sm:$0x1]
      %v1925 = vperm.slane %v1923, 0
      %v1935 = vunpack.c.l.b16 %v1915
      %v1936 = vunpack.c.l.b16 %v1916
      %v1937 = vunpack.c.l.b16 %v1917
      %v1938 = vunpack.c.l.b16 %v1918
      %v1939 = vunpack.c.l.b16 %v1919
      %v1940 = vunpack.c.l.b16 %v1920
      %v1941 = vunpack.c.l.b16 %v1921
      %v1942 = vunpack.c.l.b16 %v1922
      %v1943 = vpack.c.b16 %v1936, %v1935
      %v1944 = vpack.c.b16 %v1938, %v1937
      %v1945 = vpack.c.b16 %v1940, %v1939
      %v1946 = vpack.c.b16 %v1942, %v1941
      %vm1951 = vcmask 523264
      %v1953 = vsel %vm1951, %v1907, 0
      %v1956 = vsel %vm1951, %v1908, 0
      %v1959 = vsel %vm1951, %v1909, 0
      %v1962 = vsel %vm1951, %v1910, 0
      %v1965 = vsel %vm1951, %v1911, 0
      %v1968 = vsel %vm1951, %v1912, 0
      %v1971 = vsel %vm1951, %v1913, 0
      %v1974 = vsel %vm1951, %v1914, 0
      %1976 = vmatpush.bf16.msra.mxu0 0
      %1977 = vmatpush.bf16.msra.mxu0 0
      %1978 = vmatpush.bf16.msra.mxu0 0
      %1979 = vmatpush.bf16.msra.mxu0 0
      %1980 = vmatpush.bf16.msra.mxu0 %v1946
      %1981 = vmatpush.bf16.msra.mxu0 %v1945
      %1982 = vmatpush.bf16.msra.mxu0 %v1944
      %1983 = vmatpush.bf16.msra.mxu0 %v1943
      %1984 = vmatmul.bf16.gmra.mxu0 %v1953
      %v1985 = vpop.f32.mrf.mxu0
      %v1986 = vadd.f32 %v1925, %v1985
      %v1987 = vpop.f32.mrf.mxu0
      %v1988 = vadd.f32 %v1925, %v1987
      %1989 = vmatmul.bf16.gmra.mxu0 %v1956
      %v1990 = vpop.f32.mrf.mxu0
      %v1991 = vadd.f32 %v1925, %v1990
      %v1992 = vpop.f32.mrf.mxu0
      %v1993 = vadd.f32 %v1925, %v1992
      %1994 = vmatmul.bf16.gmra.mxu0 %v1959
      %v1995 = vpop.f32.mrf.mxu0
      %v1996 = vadd.f32 %v1925, %v1995
      %v1997 = vpop.f32.mrf.mxu0
      %v1998 = vadd.f32 %v1925, %v1997
      %1999 = vmatmul.bf16.gmra.mxu0 %v1962
      %v2000 = vpop.f32.mrf.mxu0
      %v2001 = vadd.f32 %v1925, %v2000
      %v2002 = vpop.f32.mrf.mxu0
      %v2003 = vadd.f32 %v1925, %v2002
      %2004 = vmatmul.bf16.gmra.mxu0 %v1965
      %v2005 = vpop.f32.mrf.mxu0
      %v2006 = vadd.f32 %v1925, %v2005
      %v2007 = vpop.f32.mrf.mxu0
      %v2008 = vadd.f32 %v1925, %v2007
      %2009 = vmatmul.bf16.gmra.mxu0 %v1968
      %v2010 = vpop.f32.mrf.mxu0
      %v2011 = vadd.f32 %v1925, %v2010
      %v2012 = vpop.f32.mrf.mxu0
      %v2013 = vadd.f32 %v1925, %v2012
      %2014 = vmatmul.bf16.gmra.mxu0 %v1971
      %v2015 = vpop.f32.mrf.mxu0
      %v2016 = vadd.f32 %v1925, %v2015
      %v2017 = vpop.f32.mrf.mxu0
      %v2018 = vadd.f32 %v1925, %v2017
      %2019 = vmatmul.bf16.gmra.mxu0 %v1974
      %v2020 = vpop.f32.mrf.mxu0
      %v2021 = vadd.f32 %v1925, %v2020
      %v2022 = vpop.f32.mrf.mxu0
      %v2023 = vadd.f32 %v1925, %v2022
      %2024 = vdwg.mxu0
      %v2025 = vadd.f32 %v1086, %v1986
      %v2026 = vadd.f32 %v1087, %v1988
      %v2027 = vadd.f32 %v1088, %v1991
      %v2028 = vadd.f32 %v1089, %v1993
      %v2029 = vadd.f32 %v1090, %v1996
      %v2030 = vadd.f32 %v1091, %v1998
      %v2031 = vadd.f32 %v1092, %v2001
      %v2032 = vadd.f32 %v1093, %v2003
      %v2033 = vadd.f32 %v1094, %v2006
      %v2034 = vadd.f32 %v1095, %v2008
      %v2035 = vadd.f32 %v1096, %v2011
      %v2036 = vadd.f32 %v1097, %v2013
      %v2037 = vadd.f32 %v1098, %v2016
      %v2038 = vadd.f32 %v1099, %v2018
      %v2039 = vadd.f32 %v1100, %v2021
      %v2040 = vadd.f32 %v1101, %v2023
      %2041 = vst.msk [vmem:[%s395] sm:$0xff] %vm995, %v2025
      %2042 = vst.msk [vmem:[%s395 + $0x8] sm:$0xff] %vm995, %v2026
      %2043 = vst.msk [vmem:[%s395 + $0x10] sm:$0xff] %vm995, %v2027
      %2044 = vst.msk [vmem:[%s395 + $0x18] sm:$0xff] %vm995, %v2028
      %2045 = vst.msk [vmem:[%s395 + $0x20] sm:$0xff] %vm995, %v2029
      %2046 = vst.msk [vmem:[%s395 + $0x28] sm:$0xff] %vm995, %v2030
      %2047 = vst.msk [vmem:[%s395 + $0x30] sm:$0xff] %vm995, %v2031
      %2048 = vst.msk [vmem:[%s395 + $0x38] sm:$0xff] %vm995, %v2032
      %2049 = vst.msk [vmem:[%s395 + $0x40] sm:$0xff] %vm995, %v2033
      %2050 = vst.msk [vmem:[%s395 + $0x48] sm:$0xff] %vm995, %v2034
      %2051 = vst.msk [vmem:[%s395 + $0x50] sm:$0xff] %vm995, %v2035
      %2052 = vst.msk [vmem:[%s395 + $0x58] sm:$0xff] %vm995, %v2036
      %2053 = vst.msk [vmem:[%s395 + $0x60] sm:$0xff] %vm995, %v2037
      %2054 = vst.msk [vmem:[%s395 + $0x68] sm:$0xff] %vm995, %v2038
      %2055 = vst.msk [vmem:[%s395 + $0x70] sm:$0xff] %vm995, %v2039
      %2056 = vst.msk [vmem:[%s395 + $0x78] sm:$0xff] %vm995, %v2040
      %s2057 = smul.u32 16, %s26
      %p2058 = scmp.lt.s32.totalorder %s25, 1
      %s2059 = scalar_select %p2058, %s25, 1
      %p2060 = scmp.lt.s32.totalorder %s2057, 15
      %s2061 = scalar_select %p2060, %s2057, 15
      %s2062 = smul.addr %s2059, 16
      %s2063 = sadd.s32 %s2061, %s2062
      %s2064 = smul.addr %s2063, 8
      %s2065 = scalar_lea.vmem %s10, %s2064
      // Predicated region
      $region72: #{tpu_custom_call.1} parent=59 // pred_check
        %p2066 = pneg %p273
      $region73: #{tpu_custom_call.1} parent=59 // pred_check_branch
        %2068 = sbr.rel (%p2066) target = $region75
      $region74: #{tpu_custom_call.1} parent=59 // pred_region
        %s2069 = smul.u32 16, %s26
      $region75: #{tpu_custom_call.1} parent=59 // pred_fallthru
        _
    $region60: #{tpu_custom_call.1} parent=5 // pred_fallthru
      _
    %p2070 = scmp.le.s32.totalorder 2, %s16
    // Predicated region
    $region76: #{tpu_custom_call.1} parent=5 // pred_check
      %p2071 = pneg %p2070
    $region77: #{tpu_custom_call.1} parent=5 // pred_check_branch
      %2073 = sbr.rel (%p2071) target = $region79
    $region78: #{tpu_custom_call.1} parent=5 // pred_region
      %s2074 = ssub.s32 %s16, 2
      // Predicated region
      $region80: #{tpu_custom_call.1} parent=78 // pred_check
        %p2075 = pneg %p279
      $region81: #{tpu_custom_call.1} parent=78 // pred_check_branch
        %2077 = sbr.rel (%p2075) target = $region83
      $region82: #{tpu_custom_call.1} parent=78 // pred_region
        %s2078 = smul.u32 16, %s28
        %p2079 = scmp.lt.s32.totalorder %s27, 1
        %s2080 = scalar_select %p2079, %s27, 1
        %p2081 = scmp.lt.s32.totalorder %s2078, 15
        %s2082 = scalar_select %p2081, %s2078, 15
        %s2083 = smul.addr %s2080, 16
        %s2084 = sadd.s32 %s2082, %s2083
        %s2085 = smul.addr %s2084, 8
        %s2086 = scalar_lea.vmem %s10, %s2085
      $region83: #{tpu_custom_call.1} parent=78 // pred_fallthru
        _
    $region79: #{tpu_custom_call.1} parent=5 // pred_fallthru
      _
  $region6: #{tpu_custom_call.1} parent=0 // loop_footer
    %s20 = sadd.s32 1, %s16
  $region7: #{tpu_custom_call.1} parent=0 // loop_footer_branch
    %15 = sbr.rel target = $region3
  $region8: #{tpu_custom_call.1} parent=0 // loop_exit
    _

</llo_original>
